<compile_context>
chip_gen: v7x
topology: tpu7x:2x2x1
jax: 0.10.0
libtpu: 0.0.40
codegen_flags: <defaults>
</compile_context>

<pallas_src>
import functools
import math

import jax
import jax.numpy as jnp
from jax.experimental import pallas as pl
from jax.experimental.pallas import tpu as pltpu

BN_EPS = 1e-5
LANE = 128       # pad channel dims to multiples of 128 lanes (lane-dense stores, full MXU N)
TM = 128         # node-row tile (MXU-aligned on v5e; fine on v6e/v7x)
TK = 128         # aggregation (source-node) tile for A_hat @ XW
# Set to jnp.bfloat16 on v6e/v7x to halve A_hat HBM traffic (accumulation stays f32).
AGG_DTYPE = jnp.float32


# ----------------------------- Pallas kernels ------------------------------

def _mlp_stack_kernel(num_layers, x_ref, *refs):
    # Fused pre/post-process stack for one row tile:
    #   for each layer: h = BN(ReLU(h @ W + b))  with BN folded to (scale, shift).
    out_ref = refs[-1]
    h = x_ref[...]
    for l in range(num_layers):
        w_ref, b_ref, s_ref, t_ref = refs[4 * l: 4 * l + 4]
        h = jnp.dot(h, w_ref[...], preferred_element_type=jnp.float32) + b_ref[...]
        h = jnp.maximum(h, 0.0)
        h = h * s_ref[...] + t_ref[...]
    out_ref[...] = h


def _matmul_kernel(x_ref, w_ref, o_ref):
    # GCNConv transform step: XW = x @ W (bias folded into the aggregation epilogue).
    o_ref[...] = jnp.dot(x_ref[...], w_ref[...], preferred_element_type=jnp.float32)


def _agg_bn_relu_kernel(a_ref, xw_ref, s_ref, t_ref, o_ref, acc_ref):
    # Tiled GCN aggregation with f32 accumulator:
    #   out = ReLU((A_hat @ XW) * scale + shift_fused), shift_fused = b*scale + shift
    @pl.when(pl.program_id(1) == 0)
    def _():
        acc_ref[...] = jnp.zeros_like(acc_ref)

    acc_ref[...] += jnp.dot(a_ref[...], xw_ref[...],
                            preferred_element_type=jnp.float32)

    @pl.when(pl.program_id(1) == pl.num_programs(1) - 1)
    def _():
        o_ref[...] = jnp.maximum(acc_ref[...] * s_ref[...] + t_ref[...], 0.0)


def _linear_kernel(x_ref, w_ref, b_ref, o_ref):
    # classifier head: y = x @ W + b
    o_ref[...] = jnp.dot(x_ref[...], w_ref[...],
                         preferred_element_type=jnp.float32) + b_ref[...]


# ------------------------------ kernel wrappers ----------------------------

def fused_mlp_stack(x, layers):
    """layers: list of (W [Ci,Co], b [1,Co], scale [1,Co], shift [1,Co]), all padded."""
    n, c_in = x.shape
    c_out = layers[-1][0].shape[1]
    in_specs = [pl.BlockSpec((TM, c_in), lambda i: (i, 0))]
    flat = []
    for (w, b, s, t) in layers:
        ci, co = w.shape
        in_specs.append(pl.BlockSpec((ci, co), lambda i: (0, 0)))
        in_specs.append(pl.BlockSpec((1, co), lambda i: (0, 0)))
        in_specs.append(pl.BlockSpec((1, co), lambda i: (0, 0)))
        in_specs.append(pl.BlockSpec((1, co), lambda i: (0, 0)))
        flat += [w, b, s, t]
    return pl.pallas_call(
        functools.partial(_mlp_stack_kernel, len(layers)),
        out_shape=jax.ShapeDtypeStruct((n, c_out), jnp.float32),
        grid=(pl.cdiv(n, TM),),
        in_specs=in_specs,
        out_specs=pl.BlockSpec((TM, c_out), lambda i: (i, 0)),
        compiler_params=pltpu.CompilerParams(dimension_semantics=("parallel",)),
    )(x, *flat)


def transform(x, w):
    n, c_in = x.shape
    c_out = w.shape[1]
    return pl.pallas_call(
        _matmul_kernel,
        out_shape=jax.ShapeDtypeStruct((n, c_out), jnp.float32),
        grid=(pl.cdiv(n, TM),),
        in_specs=[pl.BlockSpec((TM, c_in), lambda i: (i, 0)),
                  pl.BlockSpec((c_in, c_out), lambda i: (0, 0))],
        out_specs=pl.BlockSpec((TM, c_out), lambda i: (i, 0)),
        compiler_params=pltpu.CompilerParams(dimension_semantics=("parallel",)),
    )(x, w)


def gcn_aggregate(a_hat, xw, scale, shift_fused):
    """Tiled A_hat @ XW with accumulator + fused BN(scale/shift) + ReLU epilogue."""
    n = a_hat.shape[0]
    c_out = xw.shape[1]
    a_hat = a_hat.astype(AGG_DTYPE)
    xw = xw.astype(AGG_DTYPE)
    vec = pl.BlockSpec((1, c_out), lambda i, k: (0, 0))
    return pl.pallas_call(
        _agg_bn_relu_kernel,
        out_shape=jax.ShapeDtypeStruct((n, c_out), jnp.float32),
        grid=(pl.cdiv(n, TM), pl.cdiv(n, TK)),
        in_specs=[
            pl.BlockSpec((TM, TK), lambda i, k: (i, k)),
            pl.BlockSpec((TK, c_out), lambda i, k: (k, 0)),
            vec, vec,
        ],
        out_specs=pl.BlockSpec((TM, c_out), lambda i, k: (i, 0)),
        scratch_shapes=[pltpu.VMEM((TM, c_out), jnp.float32)],
        compiler_params=pltpu.CompilerParams(
            dimension_semantics=("parallel", "arbitrary")),
    )(a_hat, xw, scale, shift_fused)


def linear(x, w, b):
    n, c_in = x.shape
    c_out = w.shape[1]
    return pl.pallas_call(
        _linear_kernel,
        out_shape=jax.ShapeDtypeStruct((n, c_out), jnp.float32),
        grid=(pl.cdiv(n, TM),),
        in_specs=[pl.BlockSpec((TM, c_in), lambda i: (i, 0)),
                  pl.BlockSpec((c_in, c_out), lambda i: (0, 0)),
                  pl.BlockSpec((1, c_out), lambda i: (0, 0))],
        out_specs=pl.BlockSpec((TM, c_out), lambda i: (i, 0)),
        compiler_params=pltpu.CompilerParams(dimension_semantics=("parallel",)),
    )(x, w, b)


# ------------------------------- glue (plain JAX) ---------------------------

def _round_up(n, m):
    return ((n + m - 1) // m) * m


def _pad2d(a, rows, cols):
    return jnp.pad(a, ((0, rows - a.shape[0]), (0, cols - a.shape[1])))


def _fold_bn(gamma, beta, mean, var):
    scale = gamma * jax.lax.rsqrt(var + BN_EPS)
    shift = beta - mean * scale
    return scale, shift


def gcn_norm_dense(edge_index, edge_weight, num_nodes):
    """PyG GCNConv normalization (add self-loops, D^-1/2 (A+I) D^-1/2) as dense [N,N]."""
    # TODO(synk): dense O(N^2) A_hat is only viable for small/medium graphs; large graphs
    # need a sparse/blocked gather formulation.
    src, dst = edge_index[0], edge_index[1]
    loop = jnp.arange(num_nodes, dtype=src.dtype)
    src = jnp.concatenate([src, loop])
    dst = jnp.concatenate([dst, loop])
    w = jnp.concatenate([edge_weight, jnp.ones((num_nodes,), edge_weight.dtype)])
    deg = jnp.zeros((num_nodes,), edge_weight.dtype).at[dst].add(w)
    dinv = jnp.where(deg > 0, jax.lax.rsqrt(deg), 0.0)
    norm = dinv[src] * w * dinv[dst]
    # message src -> dst aggregated at dst:  A_hat[dst, src] = norm
    return jnp.zeros((num_nodes, num_nodes), edge_weight.dtype).at[dst, src].add(norm)


def init_params(key, n_features, n_classes, n_hidden,
                num_layers, num_layers_pre, num_layers_post):
    def dense(k, c_in, c_out):
        k1, k2 = jax.random.split(k)
        bound = 1.0 / math.sqrt(c_in)
        w = jax.random.uniform(k1, (c_in, c_out), jnp.float32, -bound, bound)
        b = jax.random.uniform(k2, (1, c_out), jnp.float32, -bound, bound)
        return w, b

    def bn(k, c):
        k1, k2, k3, k4 = jax.random.split(k, 4)
        gamma = 1.0 + 0.1 * jax.random.normal(k1, (1, c), jnp.float32)
        beta = 0.1 * jax.random.normal(k2, (1, c), jnp.float32)
        mean = 0.1 * jax.random.normal(k3, (1, c), jnp.float32)
        var = 1.0 + 0.1 * jnp.abs(jax.random.normal(k4, (1, c), jnp.float32))
        return gamma, beta, mean, var

    keys = iter(jax.random.split(key, 64))
    params = {}

    pre, c_in = [], n_features
    for _ in range(num_layers_pre):
        w, b = dense(next(keys), c_in, n_hidden)
        pre.append((w, b) + bn(next(keys), n_hidden))
        c_in = n_hidden
    params["preprocess"] = pre

    conv_mult = [2 if i < num_layers - 1 else 1 for i in range(num_layers)]
    convs = []
    for i, mult in enumerate(conv_mult):
        c_in = n_hidden * (conv_mult[i - 1] if i > 0 else 1)
        c_out = n_hidden * mult
        w, b = dense(next(keys), c_in, c_out)
        convs.append((w, b) + bn(next(keys), c_out))
    params["convs"] = convs

    post = []
    for _ in range(num_layers_post):
        w, b = dense(next(keys), n_hidden, n_hidden)
        post.append((w, b) + bn(next(keys), n_hidden))
    params["postprocess"] = post

    params["classifier"] = dense(next(keys), n_hidden, n_classes)
    return params


def gnn_forward(params, x, edge_index, edge_weight):
    # Dropout layers are identity (inference mode); BatchNorm1d uses running stats.
    n, f = x.shape
    n_pad = _round_up(n, TM)

    # Dense normalized adjacency, zero-padded: padded rows/cols are zero so padded
    # (garbage) node rows never contaminate real nodes.
    a_hat = _pad2d(gcn_norm_dense(edge_index, edge_weight, n), n_pad, n_pad)

    h = _pad2d(x, n_pad, _round_up(f, LANE))

    def prep_mlp(layer):
        w, b, g, be, m, v = layer
        ci, co = w.shape
        ci_p, co_p = _round_up(ci, LANE), _round_up(co, LANE)
        s, t = _fold_bn(g, be, m, v)
        return (_pad2d(w, ci_p, co_p), _pad2d(b, 1, co_p),
                _pad2d(s, 1, co_p), _pad2d(t, 1, co_p))

    # preprocess: single fused pallas_call over the whole stack
    h = fused_mlp_stack(h, [prep_mlp(l) for l in params["preprocess"]])

    # conv layers: hoisted transform matmul, then tiled aggregation + folded BN + ReLU
    for (w, b, g, be, m, v) in params["convs"]:
        ci, co = w.shape
        ci_p, co_p = _round_up(ci, LANE), _round_up(co, LANE)
        s, t = _fold_bn(g, be, m, v)
        t_fused = b * s + t  # fold conv bias into BN shift: (A@XW + b)*s + t
        xw = transform(h, _pad2d(w, ci_p, co_p))
        h = gcn_aggregate(a_hat, xw, _pad2d(s, 1, co_p), _pad2d(t_fused, 1, co_p))

    # postprocess: single fused pallas_call over the whole stack
    h = fused_mlp_stack(h, [prep_mlp(l) for l in params["postprocess"]])

    # classifier (lane-padded output, sliced back)
    w, b = params["classifier"]
    ci, co = w.shape
    out = linear(h, _pad2d(w, _round_up(ci, LANE), _round_up(co, LANE)),
                 _pad2d(b, 1, _round_up(co, LANE)))
    return out[:n, :co]


def reference_forward(params, x, edge_index, edge_weight):
    # pure-JAX reference for correctness check
    def bn_apply(h, g, be, m, v):
        return (h - m) * jax.lax.rsqrt(v + BN_EPS) * g + be

    a_hat = gcn_norm_dense(edge_index, edge_weight, x.shape[0])
    h = x
    for (w, b, g, be, m, v) in params["preprocess"]:
        h = bn_apply(jnp.maximum(h @ w + b, 0.0), g, be, m, v)
    for (w, b, g, be, m, v) in params["convs"]:
        h = jnp.maximum(bn_apply(a_hat @ (h @ w) + b, g, be, m, v), 0.0)
    for (w, b, g, be, m, v) in params["postprocess"]:
        h = bn_apply(jnp.maximum(h @ w + b, 0.0), g, be, m, v)
    w, b = params["classifier"]
    return h @ w + b


if __name__ == "__main__":
    key = jax.random.PRNGKey(0)
    kp, kx, ke, kw = jax.random.split(key, 4)

    # small GNN config
    N, E = 64, 128
    n_features, n_hidden, n_classes = 16, 32, 8
    num_layers, num_layers_pre, num_layers_post = 2, 2, 2

    params = init_params(kp, n_features, n_classes, n_hidden,
                         num_layers, num_layers_pre, num_layers_post)

    x = jax.random.normal(kx, (N, n_features), jnp.float32)
    edge_index = jax.random.randint(ke, (2, E), 0, N, dtype=jnp.int32)
    edge_weight = jax.random.uniform(kw, (E,), jnp.float32, minval=0.5, maxval=1.5)

    fwd = jax.jit(gnn_forward)
    out = jax.block_until_ready(fwd(params, x, edge_index, edge_weight))
    assert out.shape == (N, n_classes) and out.dtype == jnp.float32

    ref = jax.block_until_ready(reference_forward(params, x, edge_index, edge_weight))
    assert jnp.allclose(out, ref, rtol=1e-2, atol=1e-2), "mismatch vs pure-JAX reference"

    print("KERNEL_OK")
</pallas_src>

<mosaic_0001>
module attributes {stable_mosaic.version = 11 : i64} {
  func.func private @main(%arg0: i32) attributes {dimension_semantics = [#tpu.dimension_semantics<core_parallel>], iteration_bounds = array<i64: 2>, tpu.core_type = #tpu.core_type<sc_scalar_subcore>, window_params = []} {
    return
  }
}

module attributes {stable_mosaic.version = 11 : i64} {
  func.func private @main(%arg0: i32) attributes {dimension_semantics = [#tpu.dimension_semantics<core_parallel>], iteration_bounds = array<i64: 2>, tpu.core_type = #tpu.core_type<sc_scalar_subcore>, window_params = []} {
    return
  }
}

module attributes {stable_mosaic.version = 11 : i64} {
  func.func @_mlp_stack_kernel(%arg0: i32, %arg1: memref<128x128xf32, #tpu.memory_space<vmem>>, %arg2: memref<128x128xf32, #tpu.memory_space<vmem>>, %arg3: memref<1x128xf32, #tpu.memory_space<vmem>>, %arg4: memref<1x128xf32, #tpu.memory_space<vmem>>, %arg5: memref<1x128xf32, #tpu.memory_space<vmem>>, %arg6: memref<128x128xf32, #tpu.memory_space<vmem>>, %arg7: memref<1x128xf32, #tpu.memory_space<vmem>>, %arg8: memref<1x128xf32, #tpu.memory_space<vmem>>, %arg9: memref<1x128xf32, #tpu.memory_space<vmem>>, %arg10: memref<128x128xf32, #tpu.memory_space<vmem>>) attributes {dimension_semantics = [#tpu.dimension_semantics<parallel>], iteration_bounds = array<i64: 1>, scalar_prefetch = 0 : i64, scratch_operands = 0 : i64, tpu.core_type = #tpu.core_type<tc>, window_params = [{transform_indices = @transform_0, window_bounds = array<i64: 128, 128>}, {pipeline_mode = #tpu.pipeline_mode<synchronous>, transform_indices = @transform_1, window_bounds = array<i64: 128, 128>}, {pipeline_mode = #tpu.pipeline_mode<synchronous>, transform_indices = @transform_2, window_bounds = array<i64: 1, 128>}, {pipeline_mode = #tpu.pipeline_mode<synchronous>, transform_indices = @transform_3, window_bounds = array<i64: 1, 128>}, {pipeline_mode = #tpu.pipeline_mode<synchronous>, transform_indices = @transform_4, window_bounds = array<i64: 1, 128>}, {pipeline_mode = #tpu.pipeline_mode<synchronous>, transform_indices = @transform_5, window_bounds = array<i64: 128, 128>}, {pipeline_mode = #tpu.pipeline_mode<synchronous>, transform_indices = @transform_6, window_bounds = array<i64: 1, 128>}, {pipeline_mode = #tpu.pipeline_mode<synchronous>, transform_indices = @transform_7, window_bounds = array<i64: 1, 128>}, {pipeline_mode = #tpu.pipeline_mode<synchronous>, transform_indices = @transform_8, window_bounds = array<i64: 1, 128>}, {transform_indices = @transform_9, window_bounds = array<i64: 128, 128>}]} {
    %c0 = arith.constant 0 : index
    %c0_0 = arith.constant 0 : index
    %0 = vector.load %arg1[%c0, %c0_0] : memref<128x128xf32, #tpu.memory_space<vmem>>, vector<128x128xf32>
    %c0_1 = arith.constant 0 : index
    %c0_2 = arith.constant 0 : index
    %1 = vector.load %arg2[%c0_1, %c0_2] : memref<128x128xf32, #tpu.memory_space<vmem>>, vector<128x128xf32>
    %cst = arith.constant dense<0.000000e+00> : vector<128x128xf32>
    %2 = tpu.matmul %0, %1, %cst {dimension_numbers = #tpu.dot_dimension_numbers<[1], [0], [0], [1], [0, 0, 1, 1], [], []>} : vector<128x128xf32>, vector<128x128xf32>, vector<128x128xf32> -> vector<128x128xf32>
    %c0_3 = arith.constant 0 : index
    %c0_4 = arith.constant 0 : index
    %3 = vector.load %arg3[%c0_3, %c0_4] : memref<1x128xf32, #tpu.memory_space<vmem>>, vector<1x128xf32>
    %4 = vector.broadcast %3 : vector<1x128xf32> to vector<128x128xf32>
    %5 = arith.addf %2, %4 : vector<128x128xf32>
    %cst_5 = arith.constant 0.000000e+00 : f32
    %6 = vector.broadcast %cst_5 : f32 to vector<128x128xf32>
    %7 = arith.maximumf %5, %6 : vector<128x128xf32>
    %c0_6 = arith.constant 0 : index
    %c0_7 = arith.constant 0 : index
    %8 = vector.load %arg4[%c0_6, %c0_7] : memref<1x128xf32, #tpu.memory_space<vmem>>, vector<1x128xf32>
    %9 = vector.broadcast %8 : vector<1x128xf32> to vector<128x128xf32>
    %10 = arith.mulf %7, %9 : vector<128x128xf32>
    %c0_8 = arith.constant 0 : index
    %c0_9 = arith.constant 0 : index
    %11 = vector.load %arg5[%c0_8, %c0_9] : memref<1x128xf32, #tpu.memory_space<vmem>>, vector<1x128xf32>
    %12 = vector.broadcast %11 : vector<1x128xf32> to vector<128x128xf32>
    %13 = arith.addf %10, %12 : vector<128x128xf32>
    %c0_10 = arith.constant 0 : index
    %c0_11 = arith.constant 0 : index
    %14 = vector.load %arg6[%c0_10, %c0_11] : memref<128x128xf32, #tpu.memory_space<vmem>>, vector<128x128xf32>
    %cst_12 = arith.constant dense<0.000000e+00> : vector<128x128xf32>
    %15 = tpu.matmul %13, %14, %cst_12 {dimension_numbers = #tpu.dot_dimension_numbers<[1], [0], [0], [1], [0, 0, 1, 1], [], []>} : vector<128x128xf32>, vector<128x128xf32>, vector<128x128xf32> -> vector<128x128xf32>
    %c0_13 = arith.constant 0 : index
    %c0_14 = arith.constant 0 : index
    %16 = vector.load %arg7[%c0_13, %c0_14] : memref<1x128xf32, #tpu.memory_space<vmem>>, vector<1x128xf32>
    %17 = vector.broadcast %16 : vector<1x128xf32> to vector<128x128xf32>
    %18 = arith.addf %15, %17 : vector<128x128xf32>
    %cst_15 = arith.constant 0.000000e+00 : f32
    %19 = vector.broadcast %cst_15 : f32 to vector<128x128xf32>
    %20 = arith.maximumf %18, %19 : vector<128x128xf32>
    %c0_16 = arith.constant 0 : index
    %c0_17 = arith.constant 0 : index
    %21 = vector.load %arg8[%c0_16, %c0_17] : memref<1x128xf32, #tpu.memory_space<vmem>>, vector<1x128xf32>
    %22 = vector.broadcast %21 : vector<1x128xf32> to vector<128x128xf32>
    %23 = arith.mulf %20, %22 : vector<128x128xf32>
    %c0_18 = arith.constant 0 : index
    %c0_19 = arith.constant 0 : index
    %24 = vector.load %arg9[%c0_18, %c0_19] : memref<1x128xf32, #tpu.memory_space<vmem>>, vector<1x128xf32>
    %25 = vector.broadcast %24 : vector<1x128xf32> to vector<128x128xf32>
    %26 = arith.addf %23, %25 : vector<128x128xf32>
    %c0_20 = arith.constant 0 : index
    %c0_21 = arith.constant 0 : index
    %27 = vector.load %arg10[%c0_20, %c0_21] : memref<128x128xf32, #tpu.memory_space<vmem>>, vector<128x128xf32>
    tpu.vector_store %arg10[%c0_20, %c0_21], %26 {strides = array<i32>} : memref<128x128xf32, #tpu.memory_space<vmem>>, vector<128x128xf32>,
    return
  }
  func.func @transform_0(%arg0: i32) -> (i32, i32) {
    %c0_i32 = arith.constant 0 : i32
    %c0_i32_0 = arith.constant 0 : i32
    return %arg0, %c0_i32 : i32, i32
  }
  func.func @transform_1(%arg0: i32) -> (i32, i32) {
    %c0_i32 = arith.constant 0 : i32
    %c0_i32_0 = arith.constant 0 : i32
    %c0_i32_1 = arith.constant 0 : i32
    return %c0_i32, %c0_i32_0 : i32, i32
  }
  func.func @transform_2(%arg0: i32) -> (i32, i32) {
    %c0_i32 = arith.constant 0 : i32
    %c0_i32_0 = arith.constant 0 : i32
    %c0_i32_1 = arith.constant 0 : i32
    return %c0_i32, %c0_i32_0 : i32, i32
  }
  func.func @transform_3(%arg0: i32) -> (i32, i32) {
    %c0_i32 = arith.constant 0 : i32
    %c0_i32_0 = arith.constant 0 : i32
    %c0_i32_1 = arith.constant 0 : i32
    return %c0_i32, %c0_i32_0 : i32, i32
  }
  func.func @transform_4(%arg0: i32) -> (i32, i32) {
    %c0_i32 = arith.constant 0 : i32
    %c0_i32_0 = arith.constant 0 : i32
    %c0_i32_1 = arith.constant 0 : i32
    return %c0_i32, %c0_i32_0 : i32, i32
  }
  func.func @transform_5(%arg0: i32) -> (i32, i32) {
    %c0_i32 = arith.constant 0 : i32
    %c0_i32_0 = arith.constant 0 : i32
    %c0_i32_1 = arith.constant 0 : i32
    return %c0_i32, %c0_i32_0 : i32, i32
  }
  func.func @transform_6(%arg0: i32) -> (i32, i32) {
    %c0_i32 = arith.constant 0 : i32
    %c0_i32_0 = arith.constant 0 : i32
    %c0_i32_1 = arith.constant 0 : i32
    return %c0_i32, %c0_i32_0 : i32, i32
  }
  func.func @transform_7(%arg0: i32) -> (i32, i32) {
    %c0_i32 = arith.constant 0 : i32
    %c0_i32_0 = arith.constant 0 : i32
    %c0_i32_1 = arith.constant 0 : i32
    return %c0_i32, %c0_i32_0 : i32, i32
  }
  func.func @transform_8(%arg0: i32) -> (i32, i32) {
    %c0_i32 = arith.constant 0 : i32
    %c0_i32_0 = arith.constant 0 : i32
    %c0_i32_1 = arith.constant 0 : i32
    return %c0_i32, %c0_i32_0 : i32, i32
  }
  func.func @transform_9(%arg0: i32) -> (i32, i32) {
    %c0_i32 = arith.constant 0 : i32
    %c0_i32_0 = arith.constant 0 : i32
    return %arg0, %c0_i32 : i32, i32
  }
}

module attributes {stable_mosaic.version = 11 : i64} {
  func.func @_matmul_kernel(%arg0: i32, %arg1: memref<128x128xf32, #tpu.memory_space<vmem>>, %arg2: memref<128x128xf32, #tpu.memory_space<vmem>>, %arg3: memref<128x128xf32, #tpu.memory_space<vmem>>) attributes {dimension_semantics = [#tpu.dimension_semantics<parallel>], iteration_bounds = array<i64: 1>, scalar_prefetch = 0 : i64, scratch_operands = 0 : i64, tpu.core_type = #tpu.core_type<tc>, window_params = [{transform_indices = @transform_0, window_bounds = array<i64: 128, 128>}, {pipeline_mode = #tpu.pipeline_mode<synchronous>, transform_indices = @transform_1, window_bounds = array<i64: 128, 128>}, {transform_indices = @transform_2, window_bounds = array<i64: 128, 128>}]} {
    %c0 = arith.constant 0 : index
    %c0_0 = arith.constant 0 : index
    %0 = vector.load %arg1[%c0, %c0_0] : memref<128x128xf32, #tpu.memory_space<vmem>>, vector<128x128xf32>
    %c0_1 = arith.constant 0 : index
    %c0_2 = arith.constant 0 : index
    %1 = vector.load %arg2[%c0_1, %c0_2] : memref<128x128xf32, #tpu.memory_space<vmem>>, vector<128x128xf32>
    %cst = arith.constant dense<0.000000e+00> : vector<128x128xf32>
    %2 = tpu.matmul %0, %1, %cst {dimension_numbers = #tpu.dot_dimension_numbers<[1], [0], [0], [1], [0, 0, 1, 1], [], []>} : vector<128x128xf32>, vector<128x128xf32>, vector<128x128xf32> -> vector<128x128xf32>
    %c0_3 = arith.constant 0 : index
    %c0_4 = arith.constant 0 : index
    %3 = vector.load %arg3[%c0_3, %c0_4] : memref<128x128xf32, #tpu.memory_space<vmem>>, vector<128x128xf32>
    tpu.vector_store %arg3[%c0_3, %c0_4], %2 {strides = array<i32>} : memref<128x128xf32, #tpu.memory_space<vmem>>, vector<128x128xf32>,
    return
  }
  func.func @transform_0(%arg0: i32) -> (i32, i32) {
    %c0_i32 = arith.constant 0 : i32
    %c0_i32_0 = arith.constant 0 : i32
    return %arg0, %c0_i32 : i32, i32
  }
  func.func @transform_1(%arg0: i32) -> (i32, i32) {
    %c0_i32 = arith.constant 0 : i32
    %c0_i32_0 = arith.constant 0 : i32
    %c0_i32_1 = arith.constant 0 : i32
    return %c0_i32, %c0_i32_0 : i32, i32
  }
  func.func @transform_2(%arg0: i32) -> (i32, i32) {
    %c0_i32 = arith.constant 0 : i32
    %c0_i32_0 = arith.constant 0 : i32
    return %arg0, %c0_i32 : i32, i32
  }
}

module attributes {stable_mosaic.version = 11 : i64} {
  func.func @_agg_bn_relu_kernel(%arg0: i32, %arg1: i32, %arg2: memref<128x128xf32, #tpu.memory_space<vmem>>, %arg3: memref<128x128xf32, #tpu.memory_space<vmem>>, %arg4: memref<1x128xf32, #tpu.memory_space<vmem>>, %arg5: memref<1x128xf32, #tpu.memory_space<vmem>>, %arg6: memref<128x128xf32, #tpu.memory_space<vmem>>, %arg7: memref<128x128xf32, #tpu.memory_space<vmem>>) attributes {dimension_semantics = [#tpu.dimension_semantics<parallel>, #tpu.dimension_semantics<arbitrary>], iteration_bounds = array<i64: 1, 1>, scalar_prefetch = 0 : i64, scratch_operands = 1 : i64, tpu.core_type = #tpu.core_type<tc>, window_params = [{transform_indices = @transform_0, window_bounds = array<i64: 128, 128>}, {transform_indices = @transform_1, window_bounds = array<i64: 128, 128>}, {pipeline_mode = #tpu.pipeline_mode<synchronous>, transform_indices = @transform_2, window_bounds = array<i64: 1, 128>}, {pipeline_mode = #tpu.pipeline_mode<synchronous>, transform_indices = @transform_3, window_bounds = array<i64: 1, 128>}, {transform_indices = @transform_4, window_bounds = array<i64: 128, 128>}]} {
    %c0_i32 = arith.constant 0 : i32
    %0 = arith.cmpi eq, %arg1, %c0_i32 : i32
    %1 = arith.extui %0 : i1 to i32
    %c0_i32_0 = arith.constant 0 : i32
    %2 = arith.cmpi ne, %1, %c0_i32_0 : i32
    scf.if %2 {
      %cst_10 = arith.constant 0.000000e+00 : f32
      %12 = vector.broadcast %cst_10 : f32 to vector<128x128xf32>
      %c0_11 = arith.constant 0 : index
      %c0_12 = arith.constant 0 : index
      %13 = vector.load %arg7[%c0_11, %c0_12] : memref<128x128xf32, #tpu.memory_space<vmem>>, vector<128x128xf32>
      tpu.vector_store %arg7[%c0_11, %c0_12], %12 {strides = array<i32>} : memref<128x128xf32, #tpu.memory_space<vmem>>, vector<128x128xf32>,
    } else {
    }
    %c0 = arith.constant 0 : index
    %c0_1 = arith.constant 0 : index
    %3 = vector.load %arg7[%c0, %c0_1] : memref<128x128xf32, #tpu.memory_space<vmem>>, vector<128x128xf32>
    %c0_2 = arith.constant 0 : index
    %c0_3 = arith.constant 0 : index
    %4 = vector.load %arg2[%c0_2, %c0_3] : memref<128x128xf32, #tpu.memory_space<vmem>>, vector<128x128xf32>
    %c0_4 = arith.constant 0 : index
    %c0_5 = arith.constant 0 : index
    %5 = vector.load %arg3[%c0_4, %c0_5] : memref<128x128xf32, #tpu.memory_space<vmem>>, vector<128x128xf32>
    %cst = arith.constant dense<0.000000e+00> : vector<128x128xf32>
    %6 = tpu.matmul %4, %5, %cst {dimension_numbers = #tpu.dot_dimension_numbers<[1], [0], [0], [1], [0, 0, 1, 1], [], []>} : vector<128x128xf32>, vector<128x128xf32>, vector<128x128xf32> -> vector<128x128xf32>
    %7 = arith.addf %3, %6 : vector<128x128xf32>
    %c0_6 = arith.constant 0 : index
    %c0_7 = arith.constant 0 : index
    %8 = vector.load %arg7[%c0_6, %c0_7] : memref<128x128xf32, #tpu.memory_space<vmem>>, vector<128x128xf32>
    tpu.vector_store %arg7[%c0_6, %c0_7], %7 {strides = array<i32>} : memref<128x128xf32, #tpu.memory_space<vmem>>, vector<128x128xf32>,
    %c0_i32_8 = arith.constant 0 : i32
    %9 = arith.cmpi eq, %arg1, %c0_i32_8 : i32
    %10 = arith.extui %9 : i1 to i32
    %c0_i32_9 = arith.constant 0 : i32
    %11 = arith.cmpi ne, %10, %c0_i32_9 : i32
    scf.if %11 {
      %c0_10 = arith.constant 0 : index
      %c0_11 = arith.constant 0 : index
      %12 = vector.load %arg7[%c0_10, %c0_11] : memref<128x128xf32, #tpu.memory_space<vmem>>, vector<128x128xf32>
      %c0_12 = arith.constant 0 : index
      %c0_13 = arith.constant 0 : index
      %13 = vector.load %arg4[%c0_12, %c0_13] : memref<1x128xf32, #tpu.memory_space<vmem>>, vector<1x128xf32>
      %14 = vector.broadcast %13 : vector<1x128xf32> to vector<128x128xf32>
      %15 = arith.mulf %12, %14 : vector<128x128xf32>
      %c0_14 = arith.constant 0 : index
      %c0_15 = arith.constant 0 : index
      %16 = vector.load %arg5[%c0_14, %c0_15] : memref<1x128xf32, #tpu.memory_space<vmem>>, vector<1x128xf32>
      %17 = vector.broadcast %16 : vector<1x128xf32> to vector<128x128xf32>
      %18 = arith.addf %15, %17 : vector<128x128xf32>
      %cst_16 = arith.constant 0.000000e+00 : f32
      %19 = vector.broadcast %cst_16 : f32 to vector<128x128xf32>
      %20 = arith.maximumf %18, %19 : vector<128x128xf32>
      %c0_17 = arith.constant 0 : index
      %c0_18 = arith.constant 0 : index
      %21 = vector.load %arg6[%c0_17, %c0_18] : memref<128x128xf32, #tpu.memory_space<vmem>>, vector<128x128xf32>
      tpu.vector_store %arg6[%c0_17, %c0_18], %20 {strides = array<i32>} : memref<128x128xf32, #tpu.memory_space<vmem>>, vector<128x128xf32>,
    } else {
    }
    return
  }
  func.func @transform_0(%arg0: i32, %arg1: i32) -> (i32, i32) {
    %c0_i32 = arith.constant 0 : i32
    return %arg0, %arg1 : i32, i32
  }
  func.func @transform_1(%arg0: i32, %arg1: i32) -> (i32, i32) {
    %c0_i32 = arith.constant 0 : i32
    %c0_i32_0 = arith.constant 0 : i32
    return %arg1, %c0_i32 : i32, i32
  }
  func.func @transform_2(%arg0: i32, %arg1: i32) -> (i32, i32) {
    %c0_i32 = arith.constant 0 : i32
    %c0_i32_0 = arith.constant 0 : i32
    %c0_i32_1 = arith.constant 0 : i32
    return %c0_i32, %c0_i32_0 : i32, i32
  }
  func.func @transform_3(%arg0: i32, %arg1: i32) -> (i32, i32) {
    %c0_i32 = arith.constant 0 : i32
    %c0_i32_0 = arith.constant 0 : i32
    %c0_i32_1 = arith.constant 0 : i32
    return %c0_i32, %c0_i32_0 : i32, i32
  }
  func.func @transform_4(%arg0: i32, %arg1: i32) -> (i32, i32) {
    %c0_i32 = arith.constant 0 : i32
    %c0_i32_0 = arith.constant 0 : i32
    return %arg0, %c0_i32 : i32, i32
  }
}

module attributes {stable_mosaic.version = 11 : i64} {
  func.func @_linear_kernel(%arg0: i32, %arg1: memref<128x128xf32, #tpu.memory_space<vmem>>, %arg2: memref<128x128xf32, #tpu.memory_space<vmem>>, %arg3: memref<1x128xf32, #tpu.memory_space<vmem>>, %arg4: memref<128x128xf32, #tpu.memory_space<vmem>>) attributes {dimension_semantics = [#tpu.dimension_semantics<parallel>], iteration_bounds = array<i64: 1>, scalar_prefetch = 0 : i64, scratch_operands = 0 : i64, tpu.core_type = #tpu.core_type<tc>, window_params = [{transform_indices = @transform_0, window_bounds = array<i64: 128, 128>}, {pipeline_mode = #tpu.pipeline_mode<synchronous>, transform_indices = @transform_1, window_bounds = array<i64: 128, 128>}, {pipeline_mode = #tpu.pipeline_mode<synchronous>, transform_indices = @transform_2, window_bounds = array<i64: 1, 128>}, {transform_indices = @transform_3, window_bounds = array<i64: 128, 128>}]} {
    %c0 = arith.constant 0 : index
    %c0_0 = arith.constant 0 : index
    %0 = vector.load %arg1[%c0, %c0_0] : memref<128x128xf32, #tpu.memory_space<vmem>>, vector<128x128xf32>
    %c0_1 = arith.constant 0 : index
    %c0_2 = arith.constant 0 : index
    %1 = vector.load %arg2[%c0_1, %c0_2] : memref<128x128xf32, #tpu.memory_space<vmem>>, vector<128x128xf32>
    %cst = arith.constant dense<0.000000e+00> : vector<128x128xf32>
    %2 = tpu.matmul %0, %1, %cst {dimension_numbers = #tpu.dot_dimension_numbers<[1], [0], [0], [1], [0, 0, 1, 1], [], []>} : vector<128x128xf32>, vector<128x128xf32>, vector<128x128xf32> -> vector<128x128xf32>
    %c0_3 = arith.constant 0 : index
    %c0_4 = arith.constant 0 : index
    %3 = vector.load %arg3[%c0_3, %c0_4] : memref<1x128xf32, #tpu.memory_space<vmem>>, vector<1x128xf32>
    %4 = vector.broadcast %3 : vector<1x128xf32> to vector<128x128xf32>
    %5 = arith.addf %2, %4 : vector<128x128xf32>
    %c0_5 = arith.constant 0 : index
    %c0_6 = arith.constant 0 : index
    %6 = vector.load %arg4[%c0_5, %c0_6] : memref<128x128xf32, #tpu.memory_space<vmem>>, vector<128x128xf32>
    tpu.vector_store %arg4[%c0_5, %c0_6], %5 {strides = array<i32>} : memref<128x128xf32, #tpu.memory_space<vmem>>, vector<128x128xf32>,
    return
  }
  func.func @transform_0(%arg0: i32) -> (i32, i32) {
    %c0_i32 = arith.constant 0 : i32
    %c0_i32_0 = arith.constant 0 : i32
    return %arg0, %c0_i32 : i32, i32
  }
  func.func @transform_1(%arg0: i32) -> (i32, i32) {
    %c0_i32 = arith.constant 0 : i32
    %c0_i32_0 = arith.constant 0 : i32
    %c0_i32_1 = arith.constant 0 : i32
    return %c0_i32, %c0_i32_0 : i32, i32
  }
  func.func @transform_2(%arg0: i32) -> (i32, i32) {
    %c0_i32 = arith.constant 0 : i32
    %c0_i32_0 = arith.constant 0 : i32
    %c0_i32_1 = arith.constant 0 : i32
    return %c0_i32, %c0_i32_0 : i32, i32
  }
  func.func @transform_3(%arg0: i32) -> (i32, i32) {
    %c0_i32 = arith.constant 0 : i32
    %c0_i32_0 = arith.constant 0 : i32
    return %arg0, %c0_i32 : i32, i32
  }
}

</mosaic_0001>

<llo_original>
// kernel: gnn_forward.7
$region0: #{gnn_forward.7}
  #allocation0 [shape = 'u32[]', space=smem, size = 0x4, offset = 0x4, fixed_abs, tag = 'smem constant byte address 0x4 - core index']
  #allocation1 [shape = 'u32[144,128]{1,0:T(1,128)}', space=vmem, size = 0x12000, scoped, tag = 'internal scratch']
  %s0 = inlined_call_operand.vmem [shape: f32[128,128], index: 0, kind: input, shape index: {}]
  %s1 = inlined_call_operand.vmem [shape: f32[128,128], index: 1, kind: input, shape index: {}]
  %s2 = inlined_call_operand.vmem [shape: f32[1,128], index: 2, kind: input, shape index: {}]
  %s3 = inlined_call_operand.vmem [shape: f32[1,128], index: 3, kind: input, shape index: {}]
  %s4 = inlined_call_operand.vmem [shape: f32[1,128], index: 4, kind: input, shape index: {}]
  %s5 = inlined_call_operand.vmem [shape: f32[128,128], index: 5, kind: input, shape index: {}]
  %s6 = inlined_call_operand.vmem [shape: f32[1,128], index: 6, kind: input, shape index: {}]
  %s7 = inlined_call_operand.vmem [shape: f32[1,128], index: 7, kind: input, shape index: {}]
  %s8 = inlined_call_operand.vmem [shape: f32[1,128], index: 8, kind: input, shape index: {}]
  %s9 = inlined_call_operand.vmem [shape: f32[128,128], index: 9, kind: output, shape index: {}]
  %s10 = sld [smem:[#allocation0]]
  $region46: #{gnn_forward.7} parent=0
    _
  %s12 = ssub.s32 1, %s10
  %s13 = scalar_select 0, %s12, %s10
  // Predicated region
  $region2: #{gnn_forward.7} parent=0 // pred_check
    _
  $region3: #{gnn_forward.7} parent=0 // pred_check_branch
    %15 = sbr.rel (0) target = $region5
  $region4: #{gnn_forward.7} parent=0 // pred_region
    _
  $region5: #{gnn_forward.7} parent=0 // pred_fallthru
    _
  // Predicated region
  $region6: #{gnn_forward.7} parent=0 // pred_check
    _
  $region7: #{gnn_forward.7} parent=0 // pred_check_branch
    %17 = sbr.rel (0) target = $region9
  $region8: #{gnn_forward.7} parent=0 // pred_region
    _
  $region9: #{gnn_forward.7} parent=0 // pred_fallthru
    _
  // Predicated region
  $region10: #{gnn_forward.7} parent=0 // pred_check
    _
  $region11: #{gnn_forward.7} parent=0 // pred_check_branch
    %19 = sbr.rel (0) target = $region13
  $region12: #{gnn_forward.7} parent=0 // pred_region
    _
  $region13: #{gnn_forward.7} parent=0 // pred_fallthru
    _
  // Predicated region
  $region14: #{gnn_forward.7} parent=0 // pred_check
    _
  $region15: #{gnn_forward.7} parent=0 // pred_check_branch
    %21 = sbr.rel (0) target = $region17
  $region16: #{gnn_forward.7} parent=0 // pred_region
    _
  $region17: #{gnn_forward.7} parent=0 // pred_fallthru
    _
  // Predicated region
  $region18: #{gnn_forward.7} parent=0 // pred_check
    _
  $region19: #{gnn_forward.7} parent=0 // pred_check_branch
    %23 = sbr.rel (0) target = $region21
  $region20: #{gnn_forward.7} parent=0 // pred_region
    _
  $region21: #{gnn_forward.7} parent=0 // pred_fallthru
    _
  // Predicated region
  $region22: #{gnn_forward.7} parent=0 // pred_check
    _
  $region23: #{gnn_forward.7} parent=0 // pred_check_branch
    %25 = sbr.rel (0) target = $region25
  $region24: #{gnn_forward.7} parent=0 // pred_region
    _
  $region25: #{gnn_forward.7} parent=0 // pred_fallthru
    _
  // Predicated region
  $region26: #{gnn_forward.7} parent=0 // pred_check
    _
  $region27: #{gnn_forward.7} parent=0 // pred_check_branch
    %27 = sbr.rel (0) target = $region29
  $region28: #{gnn_forward.7} parent=0 // pred_region
    _
  $region29: #{gnn_forward.7} parent=0 // pred_fallthru
    _
  // Predicated region
  $region30: #{gnn_forward.7} parent=0 // pred_check
    _
  $region31: #{gnn_forward.7} parent=0 // pred_check_branch
    %29 = sbr.rel (0) target = $region33
  $region32: #{gnn_forward.7} parent=0 // pred_region
    _
  $region33: #{gnn_forward.7} parent=0 // pred_fallthru
    _
  // Predicated region
  $region34: #{gnn_forward.7} parent=0 // pred_check
    _
  $region35: #{gnn_forward.7} parent=0 // pred_check_branch
    %31 = sbr.rel (0) target = $region37
  $region36: #{gnn_forward.7} parent=0 // pred_region
    _
  $region37: #{gnn_forward.7} parent=0 // pred_fallthru
    _
  %v32 = vld [vmem:[%s0] sm:$0xff]
  %v33 = vld [vmem:[%s0 + $0x8] sm:$0xff]
  %v34 = vld [vmem:[%s0 + $0x10] sm:$0xff]
  %v35 = vld [vmem:[%s0 + $0x18] sm:$0xff]
  %v36 = vld [vmem:[%s0 + $0x20] sm:$0xff]
  %v37 = vld [vmem:[%s0 + $0x28] sm:$0xff]
  %v38 = vld [vmem:[%s0 + $0x30] sm:$0xff]
  %v39 = vld [vmem:[%s0 + $0x38] sm:$0xff]
  %v40 = vld [vmem:[%s0 + $0x40] sm:$0xff]
  %v41 = vld [vmem:[%s0 + $0x48] sm:$0xff]
  %v42 = vld [vmem:[%s0 + $0x50] sm:$0xff]
  %v43 = vld [vmem:[%s0 + $0x58] sm:$0xff]
  %v44 = vld [vmem:[%s0 + $0x60] sm:$0xff]
  %v45 = vld [vmem:[%s0 + $0x68] sm:$0xff]
  %v46 = vld [vmem:[%s0 + $0x70] sm:$0xff]
  %v47 = vld [vmem:[%s0 + $0x78] sm:$0xff]
  %v48 = vld [vmem:[%s1] sm:$0xff]
  %v49 = vld [vmem:[%s1 + $0x8] sm:$0xff]
  %v50 = vld [vmem:[%s1 + $0x10] sm:$0xff]
  %v51 = vld [vmem:[%s1 + $0x18] sm:$0xff]
  %v52 = vld [vmem:[%s1 + $0x20] sm:$0xff]
  %v53 = vld [vmem:[%s1 + $0x28] sm:$0xff]
  %v54 = vld [vmem:[%s1 + $0x30] sm:$0xff]
  %v55 = vld [vmem:[%s1 + $0x38] sm:$0xff]
  %v56 = vld [vmem:[%s1 + $0x40] sm:$0xff]
  %v57 = vld [vmem:[%s1 + $0x48] sm:$0xff]
  %v58 = vld [vmem:[%s1 + $0x50] sm:$0xff]
  %v59 = vld [vmem:[%s1 + $0x58] sm:$0xff]
  %v60 = vld [vmem:[%s1 + $0x60] sm:$0xff]
  %v61 = vld [vmem:[%s1 + $0x68] sm:$0xff]
  %v62 = vld [vmem:[%s1 + $0x70] sm:$0xff]
  %v63 = vld [vmem:[%s1 + $0x78] sm:$0xff]
  %v64 = vld [vmem:[%s2] sm:$0x1]
  %v66 = vlaneseq
  %v67 = vshrl.u32 %v66, 7
  %v68 = vsub.s32 0, %v67
  %v69 = vrot.slane %v64, %v68
  %71 = vmatprep.subr.mxu0 0.0
  %72 = vmatpush1.msra.mxu0 %v48
  %73 = vmatprep.subr.mxu0 0.0
  %74 = vmatpush1.msra.mxu0 %v49
  %75 = vmatprep.subr.mxu0 0.0
  %76 = vmatpush1.msra.mxu0 %v50
  %77 = vmatprep.subr.mxu0 0.0
  %78 = vmatpush1.msra.mxu0 %v51
  %79 = vmatprep.subr.mxu0 0.0
  %80 = vmatpush1.msra.mxu0 %v52
  %81 = vmatprep.subr.mxu0 0.0
  %82 = vmatpush1.msra.mxu0 %v53
  %83 = vmatprep.subr.mxu0 0.0
  %84 = vmatpush1.msra.mxu0 %v54
  %85 = vmatprep.subr.mxu0 0.0
  %86 = vmatpush1.msra.mxu0 %v55
  %87 = vmatprep.subr.mxu0 0.0
  %88 = vmatpush1.msra.mxu0 %v56
  %89 = vmatprep.subr.mxu0 0.0
  %90 = vmatpush1.msra.mxu0 %v57
  %91 = vmatprep.subr.mxu0 0.0
  %92 = vmatpush1.msra.mxu0 %v58
  %93 = vmatprep.subr.mxu0 0.0
  %94 = vmatpush1.msra.mxu0 %v59
  %95 = vmatprep.subr.mxu0 0.0
  %96 = vmatpush1.msra.mxu0 %v60
  %97 = vmatprep.subr.mxu0 0.0
  %98 = vmatpush1.msra.mxu0 %v61
  %99 = vmatprep.subr.mxu0 0.0
  %100 = vmatpush1.msra.mxu0 %v62
  %101 = vmatprep.subr.mxu0 0.0
  %102 = vmatpush1.msra.mxu0 %v63
  %103 = vmatprep.subr.mxu0 0.0
  %104 = vmatpush1.msra.mxu0 0.0
  %105 = vmatprep.subr.mxu0 0.0
  %106 = vmatpush1.msra.mxu0 0.0
  %107 = vmatprep.subr.mxu0 0.0
  %108 = vmatpush1.msra.mxu0 0.0
  %109 = vmatprep.subr.mxu0 0.0
  %110 = vmatpush1.msra.mxu0 0.0
  %111 = vmatprep.subr.mxu0 0.0
  %112 = vmatpush1.msra.mxu0 0.0
  %113 = vmatprep.subr.mxu0 0.0
  %114 = vmatpush1.msra.mxu0 0.0
  %115 = vmatprep.subr.mxu0 0.0
  %116 = vmatpush1.msra.mxu0 0.0
  %117 = vmatprep.subr.mxu0 0.0
  %118 = vmatpush1.msra.mxu0 0.0
  %119 = vmatprep.subr.mxu0 0.0
  %120 = vmatpush1.msra.mxu0 0.0
  %121 = vmatprep.subr.mxu0 0.0
  %122 = vmatpush1.msra.mxu0 0.0
  %123 = vmatprep.subr.mxu0 0.0
  %124 = vmatpush1.msra.mxu0 0.0
  %125 = vmatprep.subr.mxu0 0.0
  %126 = vmatpush1.msra.mxu0 0.0
  %127 = vmatprep.subr.mxu0 0.0
  %128 = vmatpush1.msra.mxu0 0.0
  %129 = vmatprep.subr.mxu0 0.0
  %130 = vmatpush1.msra.mxu0 0.0
  %131 = vmatprep.subr.mxu0 0.0
  %132 = vmatpush1.msra.mxu0 0.0
  %133 = vmatprep.subr.mxu0 0.0
  %134 = vmatpush1.msra.mxu0 0.0
  %135 = vmatprep.mubr.f32.mxu0 0.0
  %136 = vmatmul.mubr.f32.gmra.mrb[0].mxu0 %v32
  %v137 = vpop.f32.mrb[0].mxu0
  %v138 = vadd.f32 %v69, %v137
  %v139 = vpop.f32.mrb[0].mxu0
  %140 = vmatprep.mubr.f32.mxu0 0.0
  %141 = vmatmul.mubr.f32.gmra.mrb[0].mxu0 %v33
  %v142 = vpop.f32.mrb[0].mxu0
  %v143 = vadd.f32 %v69, %v142
  %v144 = vpop.f32.mrb[0].mxu0
  %145 = vmatprep.mubr.f32.mxu0 0.0
  %146 = vmatmul.mubr.f32.gmra.mrb[0].mxu0 %v34
  %v147 = vpop.f32.mrb[0].mxu0
  %v148 = vadd.f32 %v69, %v147
  %v149 = vpop.f32.mrb[0].mxu0
  %150 = vmatprep.mubr.f32.mxu0 0.0
  %151 = vmatmul.mubr.f32.gmra.mrb[0].mxu0 %v35
  %v152 = vpop.f32.mrb[0].mxu0
  %v153 = vadd.f32 %v69, %v152
  %v154 = vpop.f32.mrb[0].mxu0
  %155 = vmatprep.mubr.f32.mxu0 0.0
  %156 = vmatmul.mubr.f32.gmra.mrb[0].mxu0 %v36
  %v157 = vpop.f32.mrb[0].mxu0
  %v158 = vadd.f32 %v69, %v157
  %v159 = vpop.f32.mrb[0].mxu0
  %160 = vmatprep.mubr.f32.mxu0 0.0
  %161 = vmatmul.mubr.f32.gmra.mrb[0].mxu0 %v37
  %v162 = vpop.f32.mrb[0].mxu0
  %v163 = vadd.f32 %v69, %v162
  %v164 = vpop.f32.mrb[0].mxu0
  %165 = vmatprep.mubr.f32.mxu0 0.0
  %166 = vmatmul.mubr.f32.gmra.mrb[0].mxu0 %v38
  %v167 = vpop.f32.mrb[0].mxu0
  %v168 = vadd.f32 %v69, %v167
  %v169 = vpop.f32.mrb[0].mxu0
  %170 = vmatprep.mubr.f32.mxu0 0.0
  %171 = vmatmul.mubr.f32.gmra.mrb[0].mxu0 %v39
  %v172 = vpop.f32.mrb[0].mxu0
  %v173 = vadd.f32 %v69, %v172
  %v174 = vpop.f32.mrb[0].mxu0
  %175 = vmatprep.mubr.f32.mxu0 0.0
  %176 = vmatmul.mubr.f32.gmra.mrb[0].mxu0 %v40
  %v177 = vpop.f32.mrb[0].mxu0
  %v178 = vadd.f32 %v69, %v177
  %v179 = vpop.f32.mrb[0].mxu0
  %180 = vmatprep.mubr.f32.mxu0 0.0
  %181 = vmatmul.mubr.f32.gmra.mrb[0].mxu0 %v41
  %v182 = vpop.f32.mrb[0].mxu0
  %v183 = vadd.f32 %v69, %v182
  %v184 = vpop.f32.mrb[0].mxu0
  %185 = vmatprep.mubr.f32.mxu0 0.0
  %186 = vmatmul.mubr.f32.gmra.mrb[0].mxu0 %v42
  %v187 = vpop.f32.mrb[0].mxu0
  %v188 = vadd.f32 %v69, %v187
  %v189 = vpop.f32.mrb[0].mxu0
  %190 = vmatprep.mubr.f32.mxu0 0.0
  %191 = vmatmul.mubr.f32.gmra.mrb[0].mxu0 %v43
  %v192 = vpop.f32.mrb[0].mxu0
  %v193 = vadd.f32 %v69, %v192
  %v194 = vpop.f32.mrb[0].mxu0
  %195 = vmatprep.mubr.f32.mxu0 0.0
  %196 = vmatmul.mubr.f32.gmra.mrb[0].mxu0 %v44
  %v197 = vpop.f32.mrb[0].mxu0
  %v198 = vadd.f32 %v69, %v197
  %v199 = vpop.f32.mrb[0].mxu0
  %200 = vmatprep.mubr.f32.mxu0 0.0
  %201 = vmatmul.mubr.f32.gmra.mrb[0].mxu0 %v45
  %v202 = vpop.f32.mrb[0].mxu0
  %v203 = vadd.f32 %v69, %v202
  %v204 = vpop.f32.mrb[0].mxu0
  %205 = vmatprep.mubr.f32.mxu0 0.0
  %206 = vmatmul.mubr.f32.gmra.mrb[0].mxu0 %v46
  %v207 = vpop.f32.mrb[0].mxu0
  %v208 = vadd.f32 %v69, %v207
  %v209 = vpop.f32.mrb[0].mxu0
  %210 = vmatprep.mubr.f32.mxu0 0.0
  %211 = vmatmul.mubr.f32.gmra.mrb[0].mxu0 %v47
  %v212 = vpop.f32.mrb[0].mxu0
  %v213 = vadd.f32 %v69, %v212
  %v214 = vpop.f32.mrb[0].mxu0
  %215 = vdwg.mxu0
  %v216 = vmax.f32 %v138, 0.0
  %v217 = vmax.f32 %v143, 0.0
  %v218 = vmax.f32 %v148, 0.0
  %v219 = vmax.f32 %v153, 0.0
  %v220 = vmax.f32 %v158, 0.0
  %v221 = vmax.f32 %v163, 0.0
  %v222 = vmax.f32 %v168, 0.0
  %v223 = vmax.f32 %v173, 0.0
  %v224 = vmax.f32 %v178, 0.0
  %v225 = vmax.f32 %v183, 0.0
  %v226 = vmax.f32 %v188, 0.0
  %v227 = vmax.f32 %v193, 0.0
  %v228 = vmax.f32 %v198, 0.0
  %v229 = vmax.f32 %v203, 0.0
  %v230 = vmax.f32 %v208, 0.0
  %v231 = vmax.f32 %v213, 0.0
  %v232 = vld [vmem:[%s3] sm:$0x1]
  %v234 = vlaneseq
  %v235 = vshrl.u32 %v234, 7
  %v236 = vsub.s32 0, %v235
  %v237 = vrot.slane %v232, %v236
  %v239 = vmul.f32 %v216, %v237
  %v240 = vmul.f32 %v217, %v237
  %v241 = vmul.f32 %v218, %v237
  %v242 = vmul.f32 %v219, %v237
  %v243 = vmul.f32 %v220, %v237
  %v244 = vmul.f32 %v221, %v237
  %v245 = vmul.f32 %v222, %v237
  %v246 = vmul.f32 %v223, %v237
  %v247 = vmul.f32 %v224, %v237
  %v248 = vmul.f32 %v225, %v237
  %v249 = vmul.f32 %v226, %v237
  %v250 = vmul.f32 %v227, %v237
  %v251 = vmul.f32 %v228, %v237
  %v252 = vmul.f32 %v229, %v237
  %v253 = vmul.f32 %v230, %v237
  %v254 = vmul.f32 %v231, %v237
  %v255 = vld [vmem:[%s4] sm:$0x1]
  %v257 = vlaneseq
  %v258 = vshrl.u32 %v257, 7
  %v259 = vsub.s32 0, %v258
  %v260 = vrot.slane %v255, %v259
  %v262 = vadd.f32 %v239, %v260
  %v263 = vadd.f32 %v240, %v260
  %v264 = vadd.f32 %v241, %v260
  %v265 = vadd.f32 %v242, %v260
  %v266 = vadd.f32 %v243, %v260
  %v267 = vadd.f32 %v244, %v260
  %v268 = vadd.f32 %v245, %v260
  %v269 = vadd.f32 %v246, %v260
  %v270 = vadd.f32 %v247, %v260
  %v271 = vadd.f32 %v248, %v260
  %v272 = vadd.f32 %v249, %v260
  %v273 = vadd.f32 %v250, %v260
  %v274 = vadd.f32 %v251, %v260
  %v275 = vadd.f32 %v252, %v260
  %v276 = vadd.f32 %v253, %v260
  %v277 = vadd.f32 %v254, %v260
  %v278 = vld [vmem:[%s5] sm:$0xff]
  %v279 = vld [vmem:[%s5 + $0x8] sm:$0xff]
  %v280 = vld [vmem:[%s5 + $0x10] sm:$0xff]
  %v281 = vld [vmem:[%s5 + $0x18] sm:$0xff]
  %v282 = vld [vmem:[%s5 + $0x20] sm:$0xff]
  %v283 = vld [vmem:[%s5 + $0x28] sm:$0xff]
  %v284 = vld [vmem:[%s5 + $0x30] sm:$0xff]
  %v285 = vld [vmem:[%s5 + $0x38] sm:$0xff]
  %v286 = vld [vmem:[%s5 + $0x40] sm:$0xff]
  %v287 = vld [vmem:[%s5 + $0x48] sm:$0xff]
  %v288 = vld [vmem:[%s5 + $0x50] sm:$0xff]
  %v289 = vld [vmem:[%s5 + $0x58] sm:$0xff]
  %v290 = vld [vmem:[%s5 + $0x60] sm:$0xff]
  %v291 = vld [vmem:[%s5 + $0x68] sm:$0xff]
  %v292 = vld [vmem:[%s5 + $0x70] sm:$0xff]
  %v293 = vld [vmem:[%s5 + $0x78] sm:$0xff]
  %v294 = vld [vmem:[%s6] sm:$0x1]
  %v296 = vlaneseq
  %v297 = vshrl.u32 %v296, 7
  %v298 = vsub.s32 0, %v297
  %v299 = vrot.slane %v294, %v298
  %301 = vmatprep.subr.mxu0 0.0
  %302 = vmatpush1.msra.mxu0 %v278
  %303 = vmatprep.subr.mxu0 0.0
  %304 = vmatpush1.msra.mxu0 %v279
  %305 = vmatprep.subr.mxu0 0.0
  %306 = vmatpush1.msra.mxu0 %v280
  %307 = vmatprep.subr.mxu0 0.0
  %308 = vmatpush1.msra.mxu0 %v281
  %309 = vmatprep.subr.mxu0 0.0
  %310 = vmatpush1.msra.mxu0 %v282
  %311 = vmatprep.subr.mxu0 0.0
  %312 = vmatpush1.msra.mxu0 %v283
  %313 = vmatprep.subr.mxu0 0.0
  %314 = vmatpush1.msra.mxu0 %v284
  %315 = vmatprep.subr.mxu0 0.0
  %316 = vmatpush1.msra.mxu0 %v285
  %317 = vmatprep.subr.mxu0 0.0
  %318 = vmatpush1.msra.mxu0 %v286
  %319 = vmatprep.subr.mxu0 0.0
  %320 = vmatpush1.msra.mxu0 %v287
  %321 = vmatprep.subr.mxu0 0.0
  %322 = vmatpush1.msra.mxu0 %v288
  %323 = vmatprep.subr.mxu0 0.0
  %324 = vmatpush1.msra.mxu0 %v289
  %325 = vmatprep.subr.mxu0 0.0
  %326 = vmatpush1.msra.mxu0 %v290
  %327 = vmatprep.subr.mxu0 0.0
  %328 = vmatpush1.msra.mxu0 %v291
  %329 = vmatprep.subr.mxu0 0.0
  %330 = vmatpush1.msra.mxu0 %v292
  %331 = vmatprep.subr.mxu0 0.0
  %332 = vmatpush1.msra.mxu0 %v293
  %333 = vmatprep.subr.mxu0 0.0
  %334 = vmatpush1.msra.mxu0 0.0
  %335 = vmatprep.subr.mxu0 0.0
  %336 = vmatpush1.msra.mxu0 0.0
  %337 = vmatprep.subr.mxu0 0.0
  %338 = vmatpush1.msra.mxu0 0.0
  %339 = vmatprep.subr.mxu0 0.0
  %340 = vmatpush1.msra.mxu0 0.0
  %341 = vmatprep.subr.mxu0 0.0
  %342 = vmatpush1.msra.mxu0 0.0
  %343 = vmatprep.subr.mxu0 0.0
  %344 = vmatpush1.msra.mxu0 0.0
  %345 = vmatprep.subr.mxu0 0.0
  %346 = vmatpush1.msra.mxu0 0.0
  %347 = vmatprep.subr.mxu0 0.0
  %348 = vmatpush1.msra.mxu0 0.0
  %349 = vmatprep.subr.mxu0 0.0
  %350 = vmatpush1.msra.mxu0 0.0
  %351 = vmatprep.subr.mxu0 0.0
  %352 = vmatpush1.msra.mxu0 0.0
  %353 = vmatprep.subr.mxu0 0.0
  %354 = vmatpush1.msra.mxu0 0.0
  %355 = vmatprep.subr.mxu0 0.0
  %356 = vmatpush1.msra.mxu0 0.0
  %357 = vmatprep.subr.mxu0 0.0
  %358 = vmatpush1.msra.mxu0 0.0
  %359 = vmatprep.subr.mxu0 0.0
  %360 = vmatpush1.msra.mxu0 0.0
  %361 = vmatprep.subr.mxu0 0.0
  %362 = vmatpush1.msra.mxu0 0.0
  %363 = vmatprep.subr.mxu0 0.0
  %364 = vmatpush1.msra.mxu0 0.0
  %365 = vmatprep.mubr.f32.mxu0 0.0
  %366 = vmatmul.mubr.f32.gmra.mrb[0].mxu0 %v262
  %v367 = vpop.f32.mrb[0].mxu0
  %v368 = vadd.f32 %v299, %v367
  %v369 = vpop.f32.mrb[0].mxu0
  %370 = vmatprep.mubr.f32.mxu0 0.0
  %371 = vmatmul.mubr.f32.gmra.mrb[0].mxu0 %v263
  %v372 = vpop.f32.mrb[0].mxu0
  %v373 = vadd.f32 %v299, %v372
  %v374 = vpop.f32.mrb[0].mxu0
  %375 = vmatprep.mubr.f32.mxu0 0.0
  %376 = vmatmul.mubr.f32.gmra.mrb[0].mxu0 %v264
  %v377 = vpop.f32.mrb[0].mxu0
  %v378 = vadd.f32 %v299, %v377
  %v379 = vpop.f32.mrb[0].mxu0
  %380 = vmatprep.mubr.f32.mxu0 0.0
  %381 = vmatmul.mubr.f32.gmra.mrb[0].mxu0 %v265
  %v382 = vpop.f32.mrb[0].mxu0
  %v383 = vadd.f32 %v299, %v382
  %v384 = vpop.f32.mrb[0].mxu0
  %385 = vmatprep.mubr.f32.mxu0 0.0
  %386 = vmatmul.mubr.f32.gmra.mrb[0].mxu0 %v266
  %v387 = vpop.f32.mrb[0].mxu0
  %v388 = vadd.f32 %v299, %v387
  %v389 = vpop.f32.mrb[0].mxu0
  %390 = vmatprep.mubr.f32.mxu0 0.0
  %391 = vmatmul.mubr.f32.gmra.mrb[0].mxu0 %v267
  %v392 = vpop.f32.mrb[0].mxu0
  %v393 = vadd.f32 %v299, %v392
  %v394 = vpop.f32.mrb[0].mxu0
  %395 = vmatprep.mubr.f32.mxu0 0.0
  %396 = vmatmul.mubr.f32.gmra.mrb[0].mxu0 %v268
  %v397 = vpop.f32.mrb[0].mxu0
  %v398 = vadd.f32 %v299, %v397
  %v399 = vpop.f32.mrb[0].mxu0
  %400 = vmatprep.mubr.f32.mxu0 0.0
  %401 = vmatmul.mubr.f32.gmra.mrb[0].mxu0 %v269
  %v402 = vpop.f32.mrb[0].mxu0
  %v403 = vadd.f32 %v299, %v402
  %v404 = vpop.f32.mrb[0].mxu0
  %405 = vmatprep.mubr.f32.mxu0 0.0
  %406 = vmatmul.mubr.f32.gmra.mrb[0].mxu0 %v270
  %v407 = vpop.f32.mrb[0].mxu0
  %v408 = vadd.f32 %v299, %v407
  %v409 = vpop.f32.mrb[0].mxu0
  %410 = vmatprep.mubr.f32.mxu0 0.0
  %411 = vmatmul.mubr.f32.gmra.mrb[0].mxu0 %v271
  %v412 = vpop.f32.mrb[0].mxu0
  %v413 = vadd.f32 %v299, %v412
  %v414 = vpop.f32.mrb[0].mxu0
  %415 = vmatprep.mubr.f32.mxu0 0.0
  %416 = vmatmul.mubr.f32.gmra.mrb[0].mxu0 %v272
  %v417 = vpop.f32.mrb[0].mxu0
  %v418 = vadd.f32 %v299, %v417
  %v419 = vpop.f32.mrb[0].mxu0
  %420 = vmatprep.mubr.f32.mxu0 0.0
  %421 = vmatmul.mubr.f32.gmra.mrb[0].mxu0 %v273
  %v422 = vpop.f32.mrb[0].mxu0
  %v423 = vadd.f32 %v299, %v422
  %v424 = vpop.f32.mrb[0].mxu0
  %425 = vmatprep.mubr.f32.mxu0 0.0
  %426 = vmatmul.mubr.f32.gmra.mrb[0].mxu0 %v274
  %v427 = vpop.f32.mrb[0].mxu0
  %v428 = vadd.f32 %v299, %v427
  %v429 = vpop.f32.mrb[0].mxu0
  %430 = vmatprep.mubr.f32.mxu0 0.0
  %431 = vmatmul.mubr.f32.gmra.mrb[0].mxu0 %v275
  %v432 = vpop.f32.mrb[0].mxu0
  %v433 = vadd.f32 %v299, %v432
  %v434 = vpop.f32.mrb[0].mxu0
  %435 = vmatprep.mubr.f32.mxu0 0.0
  %436 = vmatmul.mubr.f32.gmra.mrb[0].mxu0 %v276
  %v437 = vpop.f32.mrb[0].mxu0
  %v438 = vadd.f32 %v299, %v437
  %v439 = vpop.f32.mrb[0].mxu0
  %440 = vmatprep.mubr.f32.mxu0 0.0
  %441 = vmatmul.mubr.f32.gmra.mrb[0].mxu0 %v277
  %v442 = vpop.f32.mrb[0].mxu0
  %v443 = vadd.f32 %v299, %v442
  %v444 = vpop.f32.mrb[0].mxu0
  %445 = vdwg.mxu0
  %v446 = vmax.f32 %v368, 0.0
  %v447 = vmax.f32 %v373, 0.0
  %v448 = vmax.f32 %v378, 0.0
  %v449 = vmax.f32 %v383, 0.0
  %v450 = vmax.f32 %v388, 0.0
  %v451 = vmax.f32 %v393, 0.0
  %v452 = vmax.f32 %v398, 0.0
  %v453 = vmax.f32 %v403, 0.0
  %v454 = vmax.f32 %v408, 0.0
  %v455 = vmax.f32 %v413, 0.0
  %v456 = vmax.f32 %v418, 0.0
  %v457 = vmax.f32 %v423, 0.0
  %v458 = vmax.f32 %v428, 0.0
  %v459 = vmax.f32 %v433, 0.0
  %v460 = vmax.f32 %v438, 0.0
  %v461 = vmax.f32 %v443, 0.0
  %v462 = vld [vmem:[%s7] sm:$0x1]
  %v464 = vlaneseq
  %v465 = vshrl.u32 %v464, 7
  %v466 = vsub.s32 0, %v465
  %v467 = vrot.slane %v462, %v466
  %v469 = vmul.f32 %v446, %v467
  %v470 = vmul.f32 %v447, %v467
  %v471 = vmul.f32 %v448, %v467
  %v472 = vmul.f32 %v449, %v467
  %v473 = vmul.f32 %v450, %v467
  %v474 = vmul.f32 %v451, %v467
  %v475 = vmul.f32 %v452, %v467
  %v476 = vmul.f32 %v453, %v467
  %v477 = vmul.f32 %v454, %v467
  %v478 = vmul.f32 %v455, %v467
  %v479 = vmul.f32 %v456, %v467
  %v480 = vmul.f32 %v457, %v467
  %v481 = vmul.f32 %v458, %v467
  %v482 = vmul.f32 %v459, %v467
  %v483 = vmul.f32 %v460, %v467
  %v484 = vmul.f32 %v461, %v467
  %v485 = vld [vmem:[%s8] sm:$0x1]
  %v487 = vlaneseq
  %v488 = vshrl.u32 %v487, 7
  %v489 = vsub.s32 0, %v488
  %v490 = vrot.slane %v485, %v489
  %v492 = vadd.f32 %v469, %v490
  %v493 = vadd.f32 %v470, %v490
  %v494 = vadd.f32 %v471, %v490
  %v495 = vadd.f32 %v472, %v490
  %v496 = vadd.f32 %v473, %v490
  %v497 = vadd.f32 %v474, %v490
  %v498 = vadd.f32 %v475, %v490
  %v499 = vadd.f32 %v476, %v490
  %v500 = vadd.f32 %v477, %v490
  %v501 = vadd.f32 %v478, %v490
  %v502 = vadd.f32 %v479, %v490
  %v503 = vadd.f32 %v480, %v490
  %v504 = vadd.f32 %v481, %v490
  %v505 = vadd.f32 %v482, %v490
  %v506 = vadd.f32 %v483, %v490
  %v507 = vadd.f32 %v484, %v490
  %508 = vst [vmem:[%s9] sm:$0xff] %v492
  %509 = vst [vmem:[%s9 + $0x8] sm:$0xff] %v493
  %510 = vst [vmem:[%s9 + $0x10] sm:$0xff] %v494
  %511 = vst [vmem:[%s9 + $0x18] sm:$0xff] %v495
  %512 = vst [vmem:[%s9 + $0x20] sm:$0xff] %v496
  %513 = vst [vmem:[%s9 + $0x28] sm:$0xff] %v497
  %514 = vst [vmem:[%s9 + $0x30] sm:$0xff] %v498
  %515 = vst [vmem:[%s9 + $0x38] sm:$0xff] %v499
  %516 = vst [vmem:[%s9 + $0x40] sm:$0xff] %v500
  %517 = vst [vmem:[%s9 + $0x48] sm:$0xff] %v501
  %518 = vst [vmem:[%s9 + $0x50] sm:$0xff] %v502
  %519 = vst [vmem:[%s9 + $0x58] sm:$0xff] %v503
  %520 = vst [vmem:[%s9 + $0x60] sm:$0xff] %v504
  %521 = vst [vmem:[%s9 + $0x68] sm:$0xff] %v505
  %522 = vst [vmem:[%s9 + $0x70] sm:$0xff] %v506
  %523 = vst [vmem:[%s9 + $0x78] sm:$0xff] %v507
  // Predicated region
  $region38: #{gnn_forward.7} parent=0 // pred_check
    _
  $region39: #{gnn_forward.7} parent=0 // pred_check_branch
    %525 = sbr.rel (0) target = $region41
  $region40: #{gnn_forward.7} parent=0 // pred_region
    _
  $region41: #{gnn_forward.7} parent=0 // pred_fallthru
    _
  // Predicated region
  $region42: #{gnn_forward.7} parent=0 // pred_check
    _
  $region43: #{gnn_forward.7} parent=0 // pred_check_branch
    %527 = sbr.rel (0) target = $region45
  $region44: #{gnn_forward.7} parent=0 // pred_region
    _
  $region45: #{gnn_forward.7} parent=0 // pred_fallthru
    _

// kernel: gnn_forward.8
$region0: #{gnn_forward.8}
  #allocation0 [shape = 'u32[]', space=smem, size = 0x4, offset = 0x4, fixed_abs, tag = 'smem constant byte address 0x4 - core index']
  #allocation1 [shape = 'u32[144,128]{1,0:T(1,128)}', space=vmem, size = 0x12000, scoped, tag = 'internal scratch']
  %s0 = inlined_call_operand.vmem [shape: f32[128,128], index: 0, kind: input, shape index: {}]
  %s1 = inlined_call_operand.vmem [shape: f32[128,128], index: 1, kind: input, shape index: {}]
  %s2 = inlined_call_operand.vmem [shape: f32[128,128], index: 2, kind: output, shape index: {}]
  %s3 = sld [smem:[#allocation0]]
  $region18: #{gnn_forward.8} parent=0
    _
  %s5 = ssub.s32 1, %s3
  %s6 = scalar_select 0, %s5, %s3
  // Predicated region
  $region2: #{gnn_forward.8} parent=0 // pred_check
    _
  $region3: #{gnn_forward.8} parent=0 // pred_check_branch
    %8 = sbr.rel (0) target = $region5
  $region4: #{gnn_forward.8} parent=0 // pred_region
    _
  $region5: #{gnn_forward.8} parent=0 // pred_fallthru
    _
  // Predicated region
  $region6: #{gnn_forward.8} parent=0 // pred_check
    _
  $region7: #{gnn_forward.8} parent=0 // pred_check_branch
    %10 = sbr.rel (0) target = $region9
  $region8: #{gnn_forward.8} parent=0 // pred_region
    _
  $region9: #{gnn_forward.8} parent=0 // pred_fallthru
    _
  %v11 = vld [vmem:[%s0] sm:$0xff]
  %v12 = vld [vmem:[%s0 + $0x8] sm:$0xff]
  %v13 = vld [vmem:[%s0 + $0x10] sm:$0xff]
  %v14 = vld [vmem:[%s0 + $0x18] sm:$0xff]
  %v15 = vld [vmem:[%s0 + $0x20] sm:$0xff]
  %v16 = vld [vmem:[%s0 + $0x28] sm:$0xff]
  %v17 = vld [vmem:[%s0 + $0x30] sm:$0xff]
  %v18 = vld [vmem:[%s0 + $0x38] sm:$0xff]
  %v19 = vld [vmem:[%s0 + $0x40] sm:$0xff]
  %v20 = vld [vmem:[%s0 + $0x48] sm:$0xff]
  %v21 = vld [vmem:[%s0 + $0x50] sm:$0xff]
  %v22 = vld [vmem:[%s0 + $0x58] sm:$0xff]
  %v23 = vld [vmem:[%s0 + $0x60] sm:$0xff]
  %v24 = vld [vmem:[%s0 + $0x68] sm:$0xff]
  %v25 = vld [vmem:[%s0 + $0x70] sm:$0xff]
  %v26 = vld [vmem:[%s0 + $0x78] sm:$0xff]
  %v27 = vld [vmem:[%s1] sm:$0xff]
  %v28 = vld [vmem:[%s1 + $0x8] sm:$0xff]
  %v29 = vld [vmem:[%s1 + $0x10] sm:$0xff]
  %v30 = vld [vmem:[%s1 + $0x18] sm:$0xff]
  %v31 = vld [vmem:[%s1 + $0x20] sm:$0xff]
  %v32 = vld [vmem:[%s1 + $0x28] sm:$0xff]
  %v33 = vld [vmem:[%s1 + $0x30] sm:$0xff]
  %v34 = vld [vmem:[%s1 + $0x38] sm:$0xff]
  %v35 = vld [vmem:[%s1 + $0x40] sm:$0xff]
  %v36 = vld [vmem:[%s1 + $0x48] sm:$0xff]
  %v37 = vld [vmem:[%s1 + $0x50] sm:$0xff]
  %v38 = vld [vmem:[%s1 + $0x58] sm:$0xff]
  %v39 = vld [vmem:[%s1 + $0x60] sm:$0xff]
  %v40 = vld [vmem:[%s1 + $0x68] sm:$0xff]
  %v41 = vld [vmem:[%s1 + $0x70] sm:$0xff]
  %v42 = vld [vmem:[%s1 + $0x78] sm:$0xff]
  %43 = vmatprep.subr.mxu0 0.0
  %44 = vmatpush1.msra.mxu0 %v27
  %45 = vmatprep.subr.mxu0 0.0
  %46 = vmatpush1.msra.mxu0 %v28
  %47 = vmatprep.subr.mxu0 0.0
  %48 = vmatpush1.msra.mxu0 %v29
  %49 = vmatprep.subr.mxu0 0.0
  %50 = vmatpush1.msra.mxu0 %v30
  %51 = vmatprep.subr.mxu0 0.0
  %52 = vmatpush1.msra.mxu0 %v31
  %53 = vmatprep.subr.mxu0 0.0
  %54 = vmatpush1.msra.mxu0 %v32
  %55 = vmatprep.subr.mxu0 0.0
  %56 = vmatpush1.msra.mxu0 %v33
  %57 = vmatprep.subr.mxu0 0.0
  %58 = vmatpush1.msra.mxu0 %v34
  %59 = vmatprep.subr.mxu0 0.0
  %60 = vmatpush1.msra.mxu0 %v35
  %61 = vmatprep.subr.mxu0 0.0
  %62 = vmatpush1.msra.mxu0 %v36
  %63 = vmatprep.subr.mxu0 0.0
  %64 = vmatpush1.msra.mxu0 %v37
  %65 = vmatprep.subr.mxu0 0.0
  %66 = vmatpush1.msra.mxu0 %v38
  %67 = vmatprep.subr.mxu0 0.0
  %68 = vmatpush1.msra.mxu0 %v39
  %69 = vmatprep.subr.mxu0 0.0
  %70 = vmatpush1.msra.mxu0 %v40
  %71 = vmatprep.subr.mxu0 0.0
  %72 = vmatpush1.msra.mxu0 %v41
  %73 = vmatprep.subr.mxu0 0.0
  %74 = vmatpush1.msra.mxu0 %v42
  %75 = vmatprep.subr.mxu0 0.0
  %76 = vmatpush1.msra.mxu0 0.0
  %77 = vmatprep.subr.mxu0 0.0
  %78 = vmatpush1.msra.mxu0 0.0
  %79 = vmatprep.subr.mxu0 0.0
  %80 = vmatpush1.msra.mxu0 0.0
  %81 = vmatprep.subr.mxu0 0.0
  %82 = vmatpush1.msra.mxu0 0.0
  %83 = vmatprep.subr.mxu0 0.0
  %84 = vmatpush1.msra.mxu0 0.0
  %85 = vmatprep.subr.mxu0 0.0
  %86 = vmatpush1.msra.mxu0 0.0
  %87 = vmatprep.subr.mxu0 0.0
  %88 = vmatpush1.msra.mxu0 0.0
  %89 = vmatprep.subr.mxu0 0.0
  %90 = vmatpush1.msra.mxu0 0.0
  %91 = vmatprep.subr.mxu0 0.0
  %92 = vmatpush1.msra.mxu0 0.0
  %93 = vmatprep.subr.mxu0 0.0
  %94 = vmatpush1.msra.mxu0 0.0
  %95 = vmatprep.subr.mxu0 0.0
  %96 = vmatpush1.msra.mxu0 0.0
  %97 = vmatprep.subr.mxu0 0.0
  %98 = vmatpush1.msra.mxu0 0.0
  %99 = vmatprep.subr.mxu0 0.0
  %100 = vmatpush1.msra.mxu0 0.0
  %101 = vmatprep.subr.mxu0 0.0
  %102 = vmatpush1.msra.mxu0 0.0
  %103 = vmatprep.subr.mxu0 0.0
  %104 = vmatpush1.msra.mxu0 0.0
  %105 = vmatprep.subr.mxu0 0.0
  %106 = vmatpush1.msra.mxu0 0.0
  %107 = vmatprep.mubr.f32.mxu0 0.0
  %108 = vmatmul.mubr.f32.gmra.mrb[0].mxu0 %v11
  %v109 = vpop.f32.mrb[0].mxu0
  %v110 = vadd.f32 0.0, %v109
  %v111 = vpop.f32.mrb[0].mxu0
  %112 = vmatprep.mubr.f32.mxu0 0.0
  %113 = vmatmul.mubr.f32.gmra.mrb[0].mxu0 %v12
  %v114 = vpop.f32.mrb[0].mxu0
  %v115 = vadd.f32 0.0, %v114
  %v116 = vpop.f32.mrb[0].mxu0
  %117 = vmatprep.mubr.f32.mxu0 0.0
  %118 = vmatmul.mubr.f32.gmra.mrb[0].mxu0 %v13
  %v119 = vpop.f32.mrb[0].mxu0
  %v120 = vadd.f32 0.0, %v119
  %v121 = vpop.f32.mrb[0].mxu0
  %122 = vmatprep.mubr.f32.mxu0 0.0
  %123 = vmatmul.mubr.f32.gmra.mrb[0].mxu0 %v14
  %v124 = vpop.f32.mrb[0].mxu0
  %v125 = vadd.f32 0.0, %v124
  %v126 = vpop.f32.mrb[0].mxu0
  %127 = vmatprep.mubr.f32.mxu0 0.0
  %128 = vmatmul.mubr.f32.gmra.mrb[0].mxu0 %v15
  %v129 = vpop.f32.mrb[0].mxu0
  %v130 = vadd.f32 0.0, %v129
  %v131 = vpop.f32.mrb[0].mxu0
  %132 = vmatprep.mubr.f32.mxu0 0.0
  %133 = vmatmul.mubr.f32.gmra.mrb[0].mxu0 %v16
  %v134 = vpop.f32.mrb[0].mxu0
  %v135 = vadd.f32 0.0, %v134
  %v136 = vpop.f32.mrb[0].mxu0
  %137 = vmatprep.mubr.f32.mxu0 0.0
  %138 = vmatmul.mubr.f32.gmra.mrb[0].mxu0 %v17
  %v139 = vpop.f32.mrb[0].mxu0
  %v140 = vadd.f32 0.0, %v139
  %v141 = vpop.f32.mrb[0].mxu0
  %142 = vmatprep.mubr.f32.mxu0 0.0
  %143 = vmatmul.mubr.f32.gmra.mrb[0].mxu0 %v18
  %v144 = vpop.f32.mrb[0].mxu0
  %v145 = vadd.f32 0.0, %v144
  %v146 = vpop.f32.mrb[0].mxu0
  %147 = vmatprep.mubr.f32.mxu0 0.0
  %148 = vmatmul.mubr.f32.gmra.mrb[0].mxu0 %v19
  %v149 = vpop.f32.mrb[0].mxu0
  %v150 = vadd.f32 0.0, %v149
  %v151 = vpop.f32.mrb[0].mxu0
  %152 = vmatprep.mubr.f32.mxu0 0.0
  %153 = vmatmul.mubr.f32.gmra.mrb[0].mxu0 %v20
  %v154 = vpop.f32.mrb[0].mxu0
  %v155 = vadd.f32 0.0, %v154
  %v156 = vpop.f32.mrb[0].mxu0
  %157 = vmatprep.mubr.f32.mxu0 0.0
  %158 = vmatmul.mubr.f32.gmra.mrb[0].mxu0 %v21
  %v159 = vpop.f32.mrb[0].mxu0
  %v160 = vadd.f32 0.0, %v159
  %v161 = vpop.f32.mrb[0].mxu0
  %162 = vmatprep.mubr.f32.mxu0 0.0
  %163 = vmatmul.mubr.f32.gmra.mrb[0].mxu0 %v22
  %v164 = vpop.f32.mrb[0].mxu0
  %v165 = vadd.f32 0.0, %v164
  %v166 = vpop.f32.mrb[0].mxu0
  %167 = vmatprep.mubr.f32.mxu0 0.0
  %168 = vmatmul.mubr.f32.gmra.mrb[0].mxu0 %v23
  %v169 = vpop.f32.mrb[0].mxu0
  %v170 = vadd.f32 0.0, %v169
  %v171 = vpop.f32.mrb[0].mxu0
  %172 = vmatprep.mubr.f32.mxu0 0.0
  %173 = vmatmul.mubr.f32.gmra.mrb[0].mxu0 %v24
  %v174 = vpop.f32.mrb[0].mxu0
  %v175 = vadd.f32 0.0, %v174
  %v176 = vpop.f32.mrb[0].mxu0
  %177 = vmatprep.mubr.f32.mxu0 0.0
  %178 = vmatmul.mubr.f32.gmra.mrb[0].mxu0 %v25
  %v179 = vpop.f32.mrb[0].mxu0
  %v180 = vadd.f32 0.0, %v179
  %v181 = vpop.f32.mrb[0].mxu0
  %182 = vmatprep.mubr.f32.mxu0 0.0
  %183 = vmatmul.mubr.f32.gmra.mrb[0].mxu0 %v26
  %v184 = vpop.f32.mrb[0].mxu0
  %v185 = vadd.f32 0.0, %v184
  %v186 = vpop.f32.mrb[0].mxu0
  %187 = vdwg.mxu0
  %188 = vst [vmem:[%s2] sm:$0xff] %v110
  %189 = vst [vmem:[%s2 + $0x8] sm:$0xff] %v115
  %190 = vst [vmem:[%s2 + $0x10] sm:$0xff] %v120
  %191 = vst [vmem:[%s2 + $0x18] sm:$0xff] %v125
  %192 = vst [vmem:[%s2 + $0x20] sm:$0xff] %v130
  %193 = vst [vmem:[%s2 + $0x28] sm:$0xff] %v135
  %194 = vst [vmem:[%s2 + $0x30] sm:$0xff] %v140
  %195 = vst [vmem:[%s2 + $0x38] sm:$0xff] %v145
  %196 = vst [vmem:[%s2 + $0x40] sm:$0xff] %v150
  %197 = vst [vmem:[%s2 + $0x48] sm:$0xff] %v155
  %198 = vst [vmem:[%s2 + $0x50] sm:$0xff] %v160
  %199 = vst [vmem:[%s2 + $0x58] sm:$0xff] %v165
  %200 = vst [vmem:[%s2 + $0x60] sm:$0xff] %v170
  %201 = vst [vmem:[%s2 + $0x68] sm:$0xff] %v175
  %202 = vst [vmem:[%s2 + $0x70] sm:$0xff] %v180
  %203 = vst [vmem:[%s2 + $0x78] sm:$0xff] %v185
  // Predicated region
  $region10: #{gnn_forward.8} parent=0 // pred_check
    _
  $region11: #{gnn_forward.8} parent=0 // pred_check_branch
    %205 = sbr.rel (0) target = $region13
  $region12: #{gnn_forward.8} parent=0 // pred_region
    _
  $region13: #{gnn_forward.8} parent=0 // pred_fallthru
    _
  // Predicated region
  $region14: #{gnn_forward.8} parent=0 // pred_check
    _
  $region15: #{gnn_forward.8} parent=0 // pred_check_branch
    %207 = sbr.rel (0) target = $region17
  $region16: #{gnn_forward.8} parent=0 // pred_region
    _
  $region17: #{gnn_forward.8} parent=0 // pred_fallthru
    _

// kernel: gnn_forward.9
$region0: #{gnn_forward.9}
  #allocation0 [shape = 'u32[]', space=smem, size = 0x4, offset = 0x4, fixed_abs, tag = 'smem constant byte address 0x4 - core index']
  #allocation1 [shape = 'u32[144,128]{1,0:T(1,128)}', space=vmem, size = 0x12000, scoped, tag = 'internal scratch']
  #allocation2 [shape = 'f32[128,128]{1,0:T(8,128)}', space=vmem, size = 0x10000, scoped, tag = 'scratch operand']
  %s0 = inlined_call_operand.vmem [shape: f32[128,128], index: 0, kind: input, shape index: {}]
  %s1 = inlined_call_operand.vmem [shape: f32[128,128], index: 1, kind: input, shape index: {}]
  %s2 = inlined_call_operand.vmem [shape: f32[1,128], index: 2, kind: input, shape index: {}]
  %s3 = inlined_call_operand.vmem [shape: f32[1,128], index: 3, kind: input, shape index: {}]
  %s4 = inlined_call_operand.vmem [shape: f32[128,128], index: 4, kind: output, shape index: {}]
  %s5 = sld [smem:[#allocation0]]
  $region34: #{gnn_forward.9} parent=0
    _
  %s7 = ssub.s32 1, %s5
  %s8 = scalar_select 0, %s7, %s5
  // Predicated region
  $region2: #{gnn_forward.9} parent=0 // pred_check
    _
  $region3: #{gnn_forward.9} parent=0 // pred_check_branch
    %10 = sbr.rel (0) target = $region5
  $region4: #{gnn_forward.9} parent=0 // pred_region
    _
  $region5: #{gnn_forward.9} parent=0 // pred_fallthru
    _
  // Predicated region
  $region6: #{gnn_forward.9} parent=0 // pred_check
    _
  $region7: #{gnn_forward.9} parent=0 // pred_check_branch
    %12 = sbr.rel (0) target = $region9
  $region8: #{gnn_forward.9} parent=0 // pred_region
    _
  $region9: #{gnn_forward.9} parent=0 // pred_fallthru
    _
  // Predicated region
  $region10: #{gnn_forward.9} parent=0 // pred_check
    _
  $region11: #{gnn_forward.9} parent=0 // pred_check_branch
    %14 = sbr.rel (0) target = $region13
  $region12: #{gnn_forward.9} parent=0 // pred_region
    _
  $region13: #{gnn_forward.9} parent=0 // pred_fallthru
    _
  // Predicated region
  $region14: #{gnn_forward.9} parent=0 // pred_check
    _
  $region15: #{gnn_forward.9} parent=0 // pred_check_branch
    %16 = sbr.rel (0) target = $region17
  $region16: #{gnn_forward.9} parent=0 // pred_region
    _
  $region17: #{gnn_forward.9} parent=0 // pred_fallthru
    _
  %p17 = scmp.eq.s32.totalorder 0, 0
  // Predicated region
  $region18: #{gnn_forward.9} parent=0 // pred_check
    %p18 = pneg %p17
  $region19: #{gnn_forward.9} parent=0 // pred_check_branch
    %20 = sbr.rel (%p18) target = $region21
  $region20: #{gnn_forward.9} parent=0 // pred_region
    %21 = vst [vmem:[#allocation2] sm:$0xff] 0.0
    %22 = vst [vmem:[#allocation2 + $0x8] sm:$0xff] 0.0
    %23 = vst [vmem:[#allocation2 + $0x10] sm:$0xff] 0.0
    %24 = vst [vmem:[#allocation2 + $0x18] sm:$0xff] 0.0
    %25 = vst [vmem:[#allocation2 + $0x20] sm:$0xff] 0.0
    %26 = vst [vmem:[#allocation2 + $0x28] sm:$0xff] 0.0
    %27 = vst [vmem:[#allocation2 + $0x30] sm:$0xff] 0.0
    %28 = vst [vmem:[#allocation2 + $0x38] sm:$0xff] 0.0
    %29 = vst [vmem:[#allocation2 + $0x40] sm:$0xff] 0.0
    %30 = vst [vmem:[#allocation2 + $0x48] sm:$0xff] 0.0
    %31 = vst [vmem:[#allocation2 + $0x50] sm:$0xff] 0.0
    %32 = vst [vmem:[#allocation2 + $0x58] sm:$0xff] 0.0
    %33 = vst [vmem:[#allocation2 + $0x60] sm:$0xff] 0.0
    %34 = vst [vmem:[#allocation2 + $0x68] sm:$0xff] 0.0
    %35 = vst [vmem:[#allocation2 + $0x70] sm:$0xff] 0.0
    %36 = vst [vmem:[#allocation2 + $0x78] sm:$0xff] 0.0
  $region21: #{gnn_forward.9} parent=0 // pred_fallthru
    _
  %v37 = vld [vmem:[#allocation2] sm:$0xff]
  %v38 = vld [vmem:[#allocation2 + $0x8] sm:$0xff]
  %v39 = vld [vmem:[#allocation2 + $0x10] sm:$0xff]
  %v40 = vld [vmem:[#allocation2 + $0x18] sm:$0xff]
  %v41 = vld [vmem:[#allocation2 + $0x20] sm:$0xff]
  %v42 = vld [vmem:[#allocation2 + $0x28] sm:$0xff]
  %v43 = vld [vmem:[#allocation2 + $0x30] sm:$0xff]
  %v44 = vld [vmem:[#allocation2 + $0x38] sm:$0xff]
  %v45 = vld [vmem:[#allocation2 + $0x40] sm:$0xff]
  %v46 = vld [vmem:[#allocation2 + $0x48] sm:$0xff]
  %v47 = vld [vmem:[#allocation2 + $0x50] sm:$0xff]
  %v48 = vld [vmem:[#allocation2 + $0x58] sm:$0xff]
  %v49 = vld [vmem:[#allocation2 + $0x60] sm:$0xff]
  %v50 = vld [vmem:[#allocation2 + $0x68] sm:$0xff]
  %v51 = vld [vmem:[#allocation2 + $0x70] sm:$0xff]
  %v52 = vld [vmem:[#allocation2 + $0x78] sm:$0xff]
  %v53 = vld [vmem:[%s0] sm:$0xff]
  %v54 = vld [vmem:[%s0 + $0x8] sm:$0xff]
  %v55 = vld [vmem:[%s0 + $0x10] sm:$0xff]
  %v56 = vld [vmem:[%s0 + $0x18] sm:$0xff]
  %v57 = vld [vmem:[%s0 + $0x20] sm:$0xff]
  %v58 = vld [vmem:[%s0 + $0x28] sm:$0xff]
  %v59 = vld [vmem:[%s0 + $0x30] sm:$0xff]
  %v60 = vld [vmem:[%s0 + $0x38] sm:$0xff]
  %v61 = vld [vmem:[%s0 + $0x40] sm:$0xff]
  %v62 = vld [vmem:[%s0 + $0x48] sm:$0xff]
  %v63 = vld [vmem:[%s0 + $0x50] sm:$0xff]
  %v64 = vld [vmem:[%s0 + $0x58] sm:$0xff]
  %v65 = vld [vmem:[%s0 + $0x60] sm:$0xff]
  %v66 = vld [vmem:[%s0 + $0x68] sm:$0xff]
  %v67 = vld [vmem:[%s0 + $0x70] sm:$0xff]
  %v68 = vld [vmem:[%s0 + $0x78] sm:$0xff]
  %v69 = vld [vmem:[%s1] sm:$0xff]
  %v70 = vld [vmem:[%s1 + $0x8] sm:$0xff]
  %v71 = vld [vmem:[%s1 + $0x10] sm:$0xff]
  %v72 = vld [vmem:[%s1 + $0x18] sm:$0xff]
  %v73 = vld [vmem:[%s1 + $0x20] sm:$0xff]
  %v74 = vld [vmem:[%s1 + $0x28] sm:$0xff]
  %v75 = vld [vmem:[%s1 + $0x30] sm:$0xff]
  %v76 = vld [vmem:[%s1 + $0x38] sm:$0xff]
  %v77 = vld [vmem:[%s1 + $0x40] sm:$0xff]
  %v78 = vld [vmem:[%s1 + $0x48] sm:$0xff]
  %v79 = vld [vmem:[%s1 + $0x50] sm:$0xff]
  %v80 = vld [vmem:[%s1 + $0x58] sm:$0xff]
  %v81 = vld [vmem:[%s1 + $0x60] sm:$0xff]
  %v82 = vld [vmem:[%s1 + $0x68] sm:$0xff]
  %v83 = vld [vmem:[%s1 + $0x70] sm:$0xff]
  %v84 = vld [vmem:[%s1 + $0x78] sm:$0xff]
  %85 = vmatprep.subr.mxu0 0.0
  %86 = vmatpush1.msra.mxu0 %v69
  %87 = vmatprep.subr.mxu0 0.0
  %88 = vmatpush1.msra.mxu0 %v70
  %89 = vmatprep.subr.mxu0 0.0
  %90 = vmatpush1.msra.mxu0 %v71
  %91 = vmatprep.subr.mxu0 0.0
  %92 = vmatpush1.msra.mxu0 %v72
  %93 = vmatprep.subr.mxu0 0.0
  %94 = vmatpush1.msra.mxu0 %v73
  %95 = vmatprep.subr.mxu0 0.0
  %96 = vmatpush1.msra.mxu0 %v74
  %97 = vmatprep.subr.mxu0 0.0
  %98 = vmatpush1.msra.mxu0 %v75
  %99 = vmatprep.subr.mxu0 0.0
  %100 = vmatpush1.msra.mxu0 %v76
  %101 = vmatprep.subr.mxu0 0.0
  %102 = vmatpush1.msra.mxu0 %v77
  %103 = vmatprep.subr.mxu0 0.0
  %104 = vmatpush1.msra.mxu0 %v78
  %105 = vmatprep.subr.mxu0 0.0
  %106 = vmatpush1.msra.mxu0 %v79
  %107 = vmatprep.subr.mxu0 0.0
  %108 = vmatpush1.msra.mxu0 %v80
  %109 = vmatprep.subr.mxu0 0.0
  %110 = vmatpush1.msra.mxu0 %v81
  %111 = vmatprep.subr.mxu0 0.0
  %112 = vmatpush1.msra.mxu0 %v82
  %113 = vmatprep.subr.mxu0 0.0
  %114 = vmatpush1.msra.mxu0 %v83
  %115 = vmatprep.subr.mxu0 0.0
  %116 = vmatpush1.msra.mxu0 %v84
  %117 = vmatprep.subr.mxu0 0.0
  %118 = vmatpush1.msra.mxu0 0.0
  %119 = vmatprep.subr.mxu0 0.0
  %120 = vmatpush1.msra.mxu0 0.0
  %121 = vmatprep.subr.mxu0 0.0
  %122 = vmatpush1.msra.mxu0 0.0
  %123 = vmatprep.subr.mxu0 0.0
  %124 = vmatpush1.msra.mxu0 0.0
  %125 = vmatprep.subr.mxu0 0.0
  %126 = vmatpush1.msra.mxu0 0.0
  %127 = vmatprep.subr.mxu0 0.0
  %128 = vmatpush1.msra.mxu0 0.0
  %129 = vmatprep.subr.mxu0 0.0
  %130 = vmatpush1.msra.mxu0 0.0
  %131 = vmatprep.subr.mxu0 0.0
  %132 = vmatpush1.msra.mxu0 0.0
  %133 = vmatprep.subr.mxu0 0.0
  %134 = vmatpush1.msra.mxu0 0.0
  %135 = vmatprep.subr.mxu0 0.0
  %136 = vmatpush1.msra.mxu0 0.0
  %137 = vmatprep.subr.mxu0 0.0
  %138 = vmatpush1.msra.mxu0 0.0
  %139 = vmatprep.subr.mxu0 0.0
  %140 = vmatpush1.msra.mxu0 0.0
  %141 = vmatprep.subr.mxu0 0.0
  %142 = vmatpush1.msra.mxu0 0.0
  %143 = vmatprep.subr.mxu0 0.0
  %144 = vmatpush1.msra.mxu0 0.0
  %145 = vmatprep.subr.mxu0 0.0
  %146 = vmatpush1.msra.mxu0 0.0
  %147 = vmatprep.subr.mxu0 0.0
  %148 = vmatpush1.msra.mxu0 0.0
  %149 = vmatprep.mubr.f32.mxu0 0.0
  %150 = vmatmul.mubr.f32.gmra.mrb[0].mxu0 %v53
  %v151 = vpop.f32.mrb[0].mxu0
  %v152 = vadd.f32 0.0, %v151
  %v153 = vpop.f32.mrb[0].mxu0
  %154 = vmatprep.mubr.f32.mxu0 0.0
  %155 = vmatmul.mubr.f32.gmra.mrb[0].mxu0 %v54
  %v156 = vpop.f32.mrb[0].mxu0
  %v157 = vadd.f32 0.0, %v156
  %v158 = vpop.f32.mrb[0].mxu0
  %159 = vmatprep.mubr.f32.mxu0 0.0
  %160 = vmatmul.mubr.f32.gmra.mrb[0].mxu0 %v55
  %v161 = vpop.f32.mrb[0].mxu0
  %v162 = vadd.f32 0.0, %v161
  %v163 = vpop.f32.mrb[0].mxu0
  %164 = vmatprep.mubr.f32.mxu0 0.0
  %165 = vmatmul.mubr.f32.gmra.mrb[0].mxu0 %v56
  %v166 = vpop.f32.mrb[0].mxu0
  %v167 = vadd.f32 0.0, %v166
  %v168 = vpop.f32.mrb[0].mxu0
  %169 = vmatprep.mubr.f32.mxu0 0.0
  %170 = vmatmul.mubr.f32.gmra.mrb[0].mxu0 %v57
  %v171 = vpop.f32.mrb[0].mxu0
  %v172 = vadd.f32 0.0, %v171
  %v173 = vpop.f32.mrb[0].mxu0
  %174 = vmatprep.mubr.f32.mxu0 0.0
  %175 = vmatmul.mubr.f32.gmra.mrb[0].mxu0 %v58
  %v176 = vpop.f32.mrb[0].mxu0
  %v177 = vadd.f32 0.0, %v176
  %v178 = vpop.f32.mrb[0].mxu0
  %179 = vmatprep.mubr.f32.mxu0 0.0
  %180 = vmatmul.mubr.f32.gmra.mrb[0].mxu0 %v59
  %v181 = vpop.f32.mrb[0].mxu0
  %v182 = vadd.f32 0.0, %v181
  %v183 = vpop.f32.mrb[0].mxu0
  %184 = vmatprep.mubr.f32.mxu0 0.0
  %185 = vmatmul.mubr.f32.gmra.mrb[0].mxu0 %v60
  %v186 = vpop.f32.mrb[0].mxu0
  %v187 = vadd.f32 0.0, %v186
  %v188 = vpop.f32.mrb[0].mxu0
  %189 = vmatprep.mubr.f32.mxu0 0.0
  %190 = vmatmul.mubr.f32.gmra.mrb[0].mxu0 %v61
  %v191 = vpop.f32.mrb[0].mxu0
  %v192 = vadd.f32 0.0, %v191
  %v193 = vpop.f32.mrb[0].mxu0
  %194 = vmatprep.mubr.f32.mxu0 0.0
  %195 = vmatmul.mubr.f32.gmra.mrb[0].mxu0 %v62
  %v196 = vpop.f32.mrb[0].mxu0
  %v197 = vadd.f32 0.0, %v196
  %v198 = vpop.f32.mrb[0].mxu0
  %199 = vmatprep.mubr.f32.mxu0 0.0
  %200 = vmatmul.mubr.f32.gmra.mrb[0].mxu0 %v63
  %v201 = vpop.f32.mrb[0].mxu0
  %v202 = vadd.f32 0.0, %v201
  %v203 = vpop.f32.mrb[0].mxu0
  %204 = vmatprep.mubr.f32.mxu0 0.0
  %205 = vmatmul.mubr.f32.gmra.mrb[0].mxu0 %v64
  %v206 = vpop.f32.mrb[0].mxu0
  %v207 = vadd.f32 0.0, %v206
  %v208 = vpop.f32.mrb[0].mxu0
  %209 = vmatprep.mubr.f32.mxu0 0.0
  %210 = vmatmul.mubr.f32.gmra.mrb[0].mxu0 %v65
  %v211 = vpop.f32.mrb[0].mxu0
  %v212 = vadd.f32 0.0, %v211
  %v213 = vpop.f32.mrb[0].mxu0
  %214 = vmatprep.mubr.f32.mxu0 0.0
  %215 = vmatmul.mubr.f32.gmra.mrb[0].mxu0 %v66
  %v216 = vpop.f32.mrb[0].mxu0
  %v217 = vadd.f32 0.0, %v216
  %v218 = vpop.f32.mrb[0].mxu0
  %219 = vmatprep.mubr.f32.mxu0 0.0
  %220 = vmatmul.mubr.f32.gmra.mrb[0].mxu0 %v67
  %v221 = vpop.f32.mrb[0].mxu0
  %v222 = vadd.f32 0.0, %v221
  %v223 = vpop.f32.mrb[0].mxu0
  %224 = vmatprep.mubr.f32.mxu0 0.0
  %225 = vmatmul.mubr.f32.gmra.mrb[0].mxu0 %v68
  %v226 = vpop.f32.mrb[0].mxu0
  %v227 = vadd.f32 0.0, %v226
  %v228 = vpop.f32.mrb[0].mxu0
  %229 = vdwg.mxu0
  %v230 = vadd.f32 %v37, %v152
  %v231 = vadd.f32 %v38, %v157
  %v232 = vadd.f32 %v39, %v162
  %v233 = vadd.f32 %v40, %v167
  %v234 = vadd.f32 %v41, %v172
  %v235 = vadd.f32 %v42, %v177
  %v236 = vadd.f32 %v43, %v182
  %v237 = vadd.f32 %v44, %v187
  %v238 = vadd.f32 %v45, %v192
  %v239 = vadd.f32 %v46, %v197
  %v240 = vadd.f32 %v47, %v202
  %v241 = vadd.f32 %v48, %v207
  %v242 = vadd.f32 %v49, %v212
  %v243 = vadd.f32 %v50, %v217
  %v244 = vadd.f32 %v51, %v222
  %v245 = vadd.f32 %v52, %v227
  %246 = vst [vmem:[#allocation2] sm:$0xff] %v230
  %247 = vst [vmem:[#allocation2 + $0x8] sm:$0xff] %v231
  %248 = vst [vmem:[#allocation2 + $0x10] sm:$0xff] %v232
  %249 = vst [vmem:[#allocation2 + $0x18] sm:$0xff] %v233
  %250 = vst [vmem:[#allocation2 + $0x20] sm:$0xff] %v234
  %251 = vst [vmem:[#allocation2 + $0x28] sm:$0xff] %v235
  %252 = vst [vmem:[#allocation2 + $0x30] sm:$0xff] %v236
  %253 = vst [vmem:[#allocation2 + $0x38] sm:$0xff] %v237
  %254 = vst [vmem:[#allocation2 + $0x40] sm:$0xff] %v238
  %255 = vst [vmem:[#allocation2 + $0x48] sm:$0xff] %v239
  %256 = vst [vmem:[#allocation2 + $0x50] sm:$0xff] %v240
  %257 = vst [vmem:[#allocation2 + $0x58] sm:$0xff] %v241
  %258 = vst [vmem:[#allocation2 + $0x60] sm:$0xff] %v242
  %259 = vst [vmem:[#allocation2 + $0x68] sm:$0xff] %v243
  %260 = vst [vmem:[#allocation2 + $0x70] sm:$0xff] %v244
  %261 = vst [vmem:[#allocation2 + $0x78] sm:$0xff] %v245
  // Predicated region
  $region22: #{gnn_forward.9} parent=0 // pred_check
    %p262 = pneg %p17
  $region23: #{gnn_forward.9} parent=0 // pred_check_branch
    %264 = sbr.rel (%p262) target = $region25
  $region24: #{gnn_forward.9} parent=0 // pred_region
    %v265 = vld [vmem:[#allocation2] sm:$0xff]
    %v266 = vld [vmem:[#allocation2 + $0x8] sm:$0xff]
    %v267 = vld [vmem:[#allocation2 + $0x10] sm:$0xff]
    %v268 = vld [vmem:[#allocation2 + $0x18] sm:$0xff]
    %v269 = vld [vmem:[#allocation2 + $0x20] sm:$0xff]
    %v270 = vld [vmem:[#allocation2 + $0x28] sm:$0xff]
    %v271 = vld [vmem:[#allocation2 + $0x30] sm:$0xff]
    %v272 = vld [vmem:[#allocation2 + $0x38] sm:$0xff]
    %v273 = vld [vmem:[#allocation2 + $0x40] sm:$0xff]
    %v274 = vld [vmem:[#allocation2 + $0x48] sm:$0xff]
    %v275 = vld [vmem:[#allocation2 + $0x50] sm:$0xff]
    %v276 = vld [vmem:[#allocation2 + $0x58] sm:$0xff]
    %v277 = vld [vmem:[#allocation2 + $0x60] sm:$0xff]
    %v278 = vld [vmem:[#allocation2 + $0x68] sm:$0xff]
    %v279 = vld [vmem:[#allocation2 + $0x70] sm:$0xff]
    %v280 = vld [vmem:[#allocation2 + $0x78] sm:$0xff]
    %v281 = vld [vmem:[%s2] sm:$0x1]
    %v283 = vlaneseq
    %v284 = vshrl.u32 %v283, 7
    %v285 = vsub.s32 0, %v284
    %v286 = vrot.slane %v281, %v285
    %v288 = vmul.f32 %v265, %v286
    %v289 = vmul.f32 %v266, %v286
    %v290 = vmul.f32 %v267, %v286
    %v291 = vmul.f32 %v268, %v286
    %v292 = vmul.f32 %v269, %v286
    %v293 = vmul.f32 %v270, %v286
    %v294 = vmul.f32 %v271, %v286
    %v295 = vmul.f32 %v272, %v286
    %v296 = vmul.f32 %v273, %v286
    %v297 = vmul.f32 %v274, %v286
    %v298 = vmul.f32 %v275, %v286
    %v299 = vmul.f32 %v276, %v286
    %v300 = vmul.f32 %v277, %v286
    %v301 = vmul.f32 %v278, %v286
    %v302 = vmul.f32 %v279, %v286
    %v303 = vmul.f32 %v280, %v286
    %v304 = vld [vmem:[%s3] sm:$0x1]
    %v306 = vlaneseq
    %v307 = vshrl.u32 %v306, 7
    %v308 = vsub.s32 0, %v307
    %v309 = vrot.slane %v304, %v308
    %v311 = vadd.f32 %v288, %v309
    %v312 = vadd.f32 %v289, %v309
    %v313 = vadd.f32 %v290, %v309
    %v314 = vadd.f32 %v291, %v309
    %v315 = vadd.f32 %v292, %v309
    %v316 = vadd.f32 %v293, %v309
    %v317 = vadd.f32 %v294, %v309
    %v318 = vadd.f32 %v295, %v309
    %v319 = vadd.f32 %v296, %v309
    %v320 = vadd.f32 %v297, %v309
    %v321 = vadd.f32 %v298, %v309
    %v322 = vadd.f32 %v299, %v309
    %v323 = vadd.f32 %v300, %v309
    %v324 = vadd.f32 %v301, %v309
    %v325 = vadd.f32 %v302, %v309
    %v326 = vadd.f32 %v303, %v309
    %v327 = vmax.f32 %v311, 0.0
    %v328 = vmax.f32 %v312, 0.0
    %v329 = vmax.f32 %v313, 0.0
    %v330 = vmax.f32 %v314, 0.0
    %v331 = vmax.f32 %v315, 0.0
    %v332 = vmax.f32 %v316, 0.0
    %v333 = vmax.f32 %v317, 0.0
    %v334 = vmax.f32 %v318, 0.0
    %v335 = vmax.f32 %v319, 0.0
    %v336 = vmax.f32 %v320, 0.0
    %v337 = vmax.f32 %v321, 0.0
    %v338 = vmax.f32 %v322, 0.0
    %v339 = vmax.f32 %v323, 0.0
    %v340 = vmax.f32 %v324, 0.0
    %v341 = vmax.f32 %v325, 0.0
    %v342 = vmax.f32 %v326, 0.0
    %343 = vst [vmem:[%s4] sm:$0xff] %v327
    %344 = vst [vmem:[%s4 + $0x8] sm:$0xff] %v328
    %345 = vst [vmem:[%s4 + $0x10] sm:$0xff] %v329
    %346 = vst [vmem:[%s4 + $0x18] sm:$0xff] %v330
    %347 = vst [vmem:[%s4 + $0x20] sm:$0xff] %v331
    %348 = vst [vmem:[%s4 + $0x28] sm:$0xff] %v332
    %349 = vst [vmem:[%s4 + $0x30] sm:$0xff] %v333
    %350 = vst [vmem:[%s4 + $0x38] sm:$0xff] %v334
    %351 = vst [vmem:[%s4 + $0x40] sm:$0xff] %v335
    %352 = vst [vmem:[%s4 + $0x48] sm:$0xff] %v336
    %353 = vst [vmem:[%s4 + $0x50] sm:$0xff] %v337
    %354 = vst [vmem:[%s4 + $0x58] sm:$0xff] %v338
    %355 = vst [vmem:[%s4 + $0x60] sm:$0xff] %v339
    %356 = vst [vmem:[%s4 + $0x68] sm:$0xff] %v340
    %357 = vst [vmem:[%s4 + $0x70] sm:$0xff] %v341
    %358 = vst [vmem:[%s4 + $0x78] sm:$0xff] %v342
  $region25: #{gnn_forward.9} parent=0 // pred_fallthru
    _
  // Predicated region
  $region26: #{gnn_forward.9} parent=0 // pred_check
    _
  $region27: #{gnn_forward.9} parent=0 // pred_check_branch
    %360 = sbr.rel (0) target = $region29
  $region28: #{gnn_forward.9} parent=0 // pred_region
    _
  $region29: #{gnn_forward.9} parent=0 // pred_fallthru
    _
  // Predicated region
  $region30: #{gnn_forward.9} parent=0 // pred_check
    _
  $region31: #{gnn_forward.9} parent=0 // pred_check_branch
    %362 = sbr.rel (0) target = $region33
  $region32: #{gnn_forward.9} parent=0 // pred_region
    _
  $region33: #{gnn_forward.9} parent=0 // pred_fallthru
    _

// kernel: gnn_forward.13
$region0: #{gnn_forward.13}
  #allocation0 [shape = 'u32[]', space=smem, size = 0x4, offset = 0x4, fixed_abs, tag = 'smem constant byte address 0x4 - core index']
  #allocation1 [shape = 'u32[144,128]{1,0:T(1,128)}', space=vmem, size = 0x12000, scoped, tag = 'internal scratch']
  %s0 = inlined_call_operand.vmem [shape: f32[128,128], index: 0, kind: input, shape index: {}]
  %s1 = inlined_call_operand.vmem [shape: f32[128,128], index: 1, kind: input, shape index: {}]
  %s2 = inlined_call_operand.vmem [shape: f32[1,128], index: 2, kind: input, shape index: {}]
  %s3 = inlined_call_operand.vmem [shape: f32[128,128], index: 3, kind: output, shape index: {}]
  %s4 = sld [smem:[#allocation0]]
  $region22: #{gnn_forward.13} parent=0
    _
  %s6 = ssub.s32 1, %s4
  %s7 = scalar_select 0, %s6, %s4
  // Predicated region
  $region2: #{gnn_forward.13} parent=0 // pred_check
    _
  $region3: #{gnn_forward.13} parent=0 // pred_check_branch
    %9 = sbr.rel (0) target = $region5
  $region4: #{gnn_forward.13} parent=0 // pred_region
    _
  $region5: #{gnn_forward.13} parent=0 // pred_fallthru
    _
  // Predicated region
  $region6: #{gnn_forward.13} parent=0 // pred_check
    _
  $region7: #{gnn_forward.13} parent=0 // pred_check_branch
    %11 = sbr.rel (0) target = $region9
  $region8: #{gnn_forward.13} parent=0 // pred_region
    _
  $region9: #{gnn_forward.13} parent=0 // pred_fallthru
    _
  // Predicated region
  $region10: #{gnn_forward.13} parent=0 // pred_check
    _
  $region11: #{gnn_forward.13} parent=0 // pred_check_branch
    %13 = sbr.rel (0) target = $region13
  $region12: #{gnn_forward.13} parent=0 // pred_region
    _
  $region13: #{gnn_forward.13} parent=0 // pred_fallthru
    _
  %v14 = vld [vmem:[%s0] sm:$0xff]
  %v15 = vld [vmem:[%s0 + $0x8] sm:$0xff]
  %v16 = vld [vmem:[%s0 + $0x10] sm:$0xff]
  %v17 = vld [vmem:[%s0 + $0x18] sm:$0xff]
  %v18 = vld [vmem:[%s0 + $0x20] sm:$0xff]
  %v19 = vld [vmem:[%s0 + $0x28] sm:$0xff]
  %v20 = vld [vmem:[%s0 + $0x30] sm:$0xff]
  %v21 = vld [vmem:[%s0 + $0x38] sm:$0xff]
  %v22 = vld [vmem:[%s0 + $0x40] sm:$0xff]
  %v23 = vld [vmem:[%s0 + $0x48] sm:$0xff]
  %v24 = vld [vmem:[%s0 + $0x50] sm:$0xff]
  %v25 = vld [vmem:[%s0 + $0x58] sm:$0xff]
  %v26 = vld [vmem:[%s0 + $0x60] sm:$0xff]
  %v27 = vld [vmem:[%s0 + $0x68] sm:$0xff]
  %v28 = vld [vmem:[%s0 + $0x70] sm:$0xff]
  %v29 = vld [vmem:[%s0 + $0x78] sm:$0xff]
  %v30 = vld [vmem:[%s1] sm:$0xff]
  %v31 = vld [vmem:[%s1 + $0x8] sm:$0xff]
  %v32 = vld [vmem:[%s1 + $0x10] sm:$0xff]
  %v33 = vld [vmem:[%s1 + $0x18] sm:$0xff]
  %v34 = vld [vmem:[%s1 + $0x20] sm:$0xff]
  %v35 = vld [vmem:[%s1 + $0x28] sm:$0xff]
  %v36 = vld [vmem:[%s1 + $0x30] sm:$0xff]
  %v37 = vld [vmem:[%s1 + $0x38] sm:$0xff]
  %v38 = vld [vmem:[%s1 + $0x40] sm:$0xff]
  %v39 = vld [vmem:[%s1 + $0x48] sm:$0xff]
  %v40 = vld [vmem:[%s1 + $0x50] sm:$0xff]
  %v41 = vld [vmem:[%s1 + $0x58] sm:$0xff]
  %v42 = vld [vmem:[%s1 + $0x60] sm:$0xff]
  %v43 = vld [vmem:[%s1 + $0x68] sm:$0xff]
  %v44 = vld [vmem:[%s1 + $0x70] sm:$0xff]
  %v45 = vld [vmem:[%s1 + $0x78] sm:$0xff]
  %v46 = vld [vmem:[%s2] sm:$0x1]
  %v48 = vlaneseq
  %v49 = vshrl.u32 %v48, 7
  %v50 = vsub.s32 0, %v49
  %v51 = vrot.slane %v46, %v50
  %53 = vmatprep.subr.mxu0 0.0
  %54 = vmatpush1.msra.mxu0 %v30
  %55 = vmatprep.subr.mxu0 0.0
  %56 = vmatpush1.msra.mxu0 %v31
  %57 = vmatprep.subr.mxu0 0.0
  %58 = vmatpush1.msra.mxu0 %v32
  %59 = vmatprep.subr.mxu0 0.0
  %60 = vmatpush1.msra.mxu0 %v33
  %61 = vmatprep.subr.mxu0 0.0
  %62 = vmatpush1.msra.mxu0 %v34
  %63 = vmatprep.subr.mxu0 0.0
  %64 = vmatpush1.msra.mxu0 %v35
  %65 = vmatprep.subr.mxu0 0.0
  %66 = vmatpush1.msra.mxu0 %v36
  %67 = vmatprep.subr.mxu0 0.0
  %68 = vmatpush1.msra.mxu0 %v37
  %69 = vmatprep.subr.mxu0 0.0
  %70 = vmatpush1.msra.mxu0 %v38
  %71 = vmatprep.subr.mxu0 0.0
  %72 = vmatpush1.msra.mxu0 %v39
  %73 = vmatprep.subr.mxu0 0.0
  %74 = vmatpush1.msra.mxu0 %v40
  %75 = vmatprep.subr.mxu0 0.0
  %76 = vmatpush1.msra.mxu0 %v41
  %77 = vmatprep.subr.mxu0 0.0
  %78 = vmatpush1.msra.mxu0 %v42
  %79 = vmatprep.subr.mxu0 0.0
  %80 = vmatpush1.msra.mxu0 %v43
  %81 = vmatprep.subr.mxu0 0.0
  %82 = vmatpush1.msra.mxu0 %v44
  %83 = vmatprep.subr.mxu0 0.0
  %84 = vmatpush1.msra.mxu0 %v45
  %85 = vmatprep.subr.mxu0 0.0
  %86 = vmatpush1.msra.mxu0 0.0
  %87 = vmatprep.subr.mxu0 0.0
  %88 = vmatpush1.msra.mxu0 0.0
  %89 = vmatprep.subr.mxu0 0.0
  %90 = vmatpush1.msra.mxu0 0.0
  %91 = vmatprep.subr.mxu0 0.0
  %92 = vmatpush1.msra.mxu0 0.0
  %93 = vmatprep.subr.mxu0 0.0
  %94 = vmatpush1.msra.mxu0 0.0
  %95 = vmatprep.subr.mxu0 0.0
  %96 = vmatpush1.msra.mxu0 0.0
  %97 = vmatprep.subr.mxu0 0.0
  %98 = vmatpush1.msra.mxu0 0.0
  %99 = vmatprep.subr.mxu0 0.0
  %100 = vmatpush1.msra.mxu0 0.0
  %101 = vmatprep.subr.mxu0 0.0
  %102 = vmatpush1.msra.mxu0 0.0
  %103 = vmatprep.subr.mxu0 0.0
  %104 = vmatpush1.msra.mxu0 0.0
  %105 = vmatprep.subr.mxu0 0.0
  %106 = vmatpush1.msra.mxu0 0.0
  %107 = vmatprep.subr.mxu0 0.0
  %108 = vmatpush1.msra.mxu0 0.0
  %109 = vmatprep.subr.mxu0 0.0
  %110 = vmatpush1.msra.mxu0 0.0
  %111 = vmatprep.subr.mxu0 0.0
  %112 = vmatpush1.msra.mxu0 0.0
  %113 = vmatprep.subr.mxu0 0.0
  %114 = vmatpush1.msra.mxu0 0.0
  %115 = vmatprep.subr.mxu0 0.0
  %116 = vmatpush1.msra.mxu0 0.0
  %117 = vmatprep.mubr.f32.mxu0 0.0
  %118 = vmatmul.mubr.f32.gmra.mrb[0].mxu0 %v14
  %v119 = vpop.f32.mrb[0].mxu0
  %v120 = vadd.f32 %v51, %v119
  %v121 = vpop.f32.mrb[0].mxu0
  %122 = vmatprep.mubr.f32.mxu0 0.0
  %123 = vmatmul.mubr.f32.gmra.mrb[0].mxu0 %v15
  %v124 = vpop.f32.mrb[0].mxu0
  %v125 = vadd.f32 %v51, %v124
  %v126 = vpop.f32.mrb[0].mxu0
  %127 = vmatprep.mubr.f32.mxu0 0.0
  %128 = vmatmul.mubr.f32.gmra.mrb[0].mxu0 %v16
  %v129 = vpop.f32.mrb[0].mxu0
  %v130 = vadd.f32 %v51, %v129
  %v131 = vpop.f32.mrb[0].mxu0
  %132 = vmatprep.mubr.f32.mxu0 0.0
  %133 = vmatmul.mubr.f32.gmra.mrb[0].mxu0 %v17
  %v134 = vpop.f32.mrb[0].mxu0
  %v135 = vadd.f32 %v51, %v134
  %v136 = vpop.f32.mrb[0].mxu0
  %137 = vmatprep.mubr.f32.mxu0 0.0
  %138 = vmatmul.mubr.f32.gmra.mrb[0].mxu0 %v18
  %v139 = vpop.f32.mrb[0].mxu0
  %v140 = vadd.f32 %v51, %v139
  %v141 = vpop.f32.mrb[0].mxu0
  %142 = vmatprep.mubr.f32.mxu0 0.0
  %143 = vmatmul.mubr.f32.gmra.mrb[0].mxu0 %v19
  %v144 = vpop.f32.mrb[0].mxu0
  %v145 = vadd.f32 %v51, %v144
  %v146 = vpop.f32.mrb[0].mxu0
  %147 = vmatprep.mubr.f32.mxu0 0.0
  %148 = vmatmul.mubr.f32.gmra.mrb[0].mxu0 %v20
  %v149 = vpop.f32.mrb[0].mxu0
  %v150 = vadd.f32 %v51, %v149
  %v151 = vpop.f32.mrb[0].mxu0
  %152 = vmatprep.mubr.f32.mxu0 0.0
  %153 = vmatmul.mubr.f32.gmra.mrb[0].mxu0 %v21
  %v154 = vpop.f32.mrb[0].mxu0
  %v155 = vadd.f32 %v51, %v154
  %v156 = vpop.f32.mrb[0].mxu0
  %157 = vmatprep.mubr.f32.mxu0 0.0
  %158 = vmatmul.mubr.f32.gmra.mrb[0].mxu0 %v22
  %v159 = vpop.f32.mrb[0].mxu0
  %v160 = vadd.f32 %v51, %v159
  %v161 = vpop.f32.mrb[0].mxu0
  %162 = vmatprep.mubr.f32.mxu0 0.0
  %163 = vmatmul.mubr.f32.gmra.mrb[0].mxu0 %v23
  %v164 = vpop.f32.mrb[0].mxu0
  %v165 = vadd.f32 %v51, %v164
  %v166 = vpop.f32.mrb[0].mxu0
  %167 = vmatprep.mubr.f32.mxu0 0.0
  %168 = vmatmul.mubr.f32.gmra.mrb[0].mxu0 %v24
  %v169 = vpop.f32.mrb[0].mxu0
  %v170 = vadd.f32 %v51, %v169
  %v171 = vpop.f32.mrb[0].mxu0
  %172 = vmatprep.mubr.f32.mxu0 0.0
  %173 = vmatmul.mubr.f32.gmra.mrb[0].mxu0 %v25
  %v174 = vpop.f32.mrb[0].mxu0
  %v175 = vadd.f32 %v51, %v174
  %v176 = vpop.f32.mrb[0].mxu0
  %177 = vmatprep.mubr.f32.mxu0 0.0
  %178 = vmatmul.mubr.f32.gmra.mrb[0].mxu0 %v26
  %v179 = vpop.f32.mrb[0].mxu0
  %v180 = vadd.f32 %v51, %v179
  %v181 = vpop.f32.mrb[0].mxu0
  %182 = vmatprep.mubr.f32.mxu0 0.0
  %183 = vmatmul.mubr.f32.gmra.mrb[0].mxu0 %v27
  %v184 = vpop.f32.mrb[0].mxu0
  %v185 = vadd.f32 %v51, %v184
  %v186 = vpop.f32.mrb[0].mxu0
  %187 = vmatprep.mubr.f32.mxu0 0.0
  %188 = vmatmul.mubr.f32.gmra.mrb[0].mxu0 %v28
  %v189 = vpop.f32.mrb[0].mxu0
  %v190 = vadd.f32 %v51, %v189
  %v191 = vpop.f32.mrb[0].mxu0
  %192 = vmatprep.mubr.f32.mxu0 0.0
  %193 = vmatmul.mubr.f32.gmra.mrb[0].mxu0 %v29
  %v194 = vpop.f32.mrb[0].mxu0
  %v195 = vadd.f32 %v51, %v194
  %v196 = vpop.f32.mrb[0].mxu0
  %197 = vdwg.mxu0
  %198 = vst [vmem:[%s3] sm:$0xff] %v120
  %199 = vst [vmem:[%s3 + $0x8] sm:$0xff] %v125
  %200 = vst [vmem:[%s3 + $0x10] sm:$0xff] %v130
  %201 = vst [vmem:[%s3 + $0x18] sm:$0xff] %v135
  %202 = vst [vmem:[%s3 + $0x20] sm:$0xff] %v140
  %203 = vst [vmem:[%s3 + $0x28] sm:$0xff] %v145
  %204 = vst [vmem:[%s3 + $0x30] sm:$0xff] %v150
  %205 = vst [vmem:[%s3 + $0x38] sm:$0xff] %v155
  %206 = vst [vmem:[%s3 + $0x40] sm:$0xff] %v160
  %207 = vst [vmem:[%s3 + $0x48] sm:$0xff] %v165
  %208 = vst [vmem:[%s3 + $0x50] sm:$0xff] %v170
  %209 = vst [vmem:[%s3 + $0x58] sm:$0xff] %v175
  %210 = vst [vmem:[%s3 + $0x60] sm:$0xff] %v180
  %211 = vst [vmem:[%s3 + $0x68] sm:$0xff] %v185
  %212 = vst [vmem:[%s3 + $0x70] sm:$0xff] %v190
  %213 = vst [vmem:[%s3 + $0x78] sm:$0xff] %v195
  // Predicated region
  $region14: #{gnn_forward.13} parent=0 // pred_check
    _
  $region15: #{gnn_forward.13} parent=0 // pred_check_branch
    %215 = sbr.rel (0) target = $region17
  $region16: #{gnn_forward.13} parent=0 // pred_region
    _
  $region17: #{gnn_forward.13} parent=0 // pred_fallthru
    _
  // Predicated region
  $region18: #{gnn_forward.13} parent=0 // pred_check
    _
  $region19: #{gnn_forward.13} parent=0 // pred_check_branch
    %217 = sbr.rel (0) target = $region21
  $region20: #{gnn_forward.13} parent=0 // pred_region
    _
  $region21: #{gnn_forward.13} parent=0 // pred_fallthru
    _

</llo_original>
